<compile_context>
chip_gen: v7x
topology: tpu7x:2x2x1
jax: 0.10.0
libtpu: 0.0.40
codegen_flags: <defaults>
</compile_context>

<pallas_src>
import functools
import math

import jax
import jax.numpy as jnp
from jax.experimental import pallas as pl
from jax.experimental.pallas import tpu as pltpu


def _policy_kernel(xh_ref, w_ref, b_ref, out_ref, *, gru_size, hidden_size,
                   action_space, out_width):
    """Single invocation; the 4 branches are statically unrolled.

    Shapes (resident in VMEM):
      xh_ref : (4, B, 3G)          f32   [x | h_prev]
      w_ref  : (4, 3G+G+H, 4G)     bf16  rows 0:3G  = fused GRU W_cat
                                         rows 3G:3G+G   = W1^T (cols 0:H)
                                         rows 3G+G:+H   = W2^T (cols 0:A)
      b_ref  : (4, 3, 4G)          f32   row 0 = [b_r|b_z|b_in|b_hn]
                                         row 1 = b1 (cols 0:H), row 2 = b2 (cols 0:A)
      out_ref: (4, B, out_width)   f32   cols 0:A = probs, A:A+G = h_out
    """
    G, H, A = gru_size, hidden_size, action_space
    n_branch, B, _ = xh_ref.shape
    w1_row = 3 * G
    w2_row = 3 * G + G
    pad = out_width - A - G

    for b in range(n_branch):                      # static unroll over branches
        xh = xh_ref[b]                             # (B, 3G) f32
        h_prev = xh[:, 2 * G:]                     # (B, G)  f32
        xh_bf = xh.astype(jnp.bfloat16)

        # ---- fused GRU pre-activations: one (B,3G)x(3G,4G) MXU dot ----
        pre = (jnp.dot(xh_bf, w_ref[b, 0:3 * G, :],
                       preferred_element_type=jnp.float32)
               + b_ref[b, 0:1, :])                 # (B, 4G)
        r = jax.nn.sigmoid(pre[:, 0:G])
        z = jax.nn.sigmoid(pre[:, G:2 * G])
        n = jnp.tanh(pre[:, 2 * G:3 * G] + r * pre[:, 3 * G:4 * G])
        h_new = (1.0 - z) * n + z * h_prev         # (B, G) f32

        # ---- MLP head (bf16 operands, f32 accumulate) ----
        a1 = jnp.maximum(
            jnp.dot(h_new.astype(jnp.bfloat16),
                    w_ref[b, w1_row:w1_row + G, 0:H],
                    preferred_element_type=jnp.float32)
            + b_ref[b, 1:2, 0:H], 0.0)             # (B, H)
        scores = (jnp.dot(a1.astype(jnp.bfloat16),
                          w_ref[b, w2_row:w2_row + H, 0:A],
                          preferred_element_type=jnp.float32)
                  + b_ref[b, 2:3, 0:A])            # (B, A)

        # ---- softmax over the action dim (torch dim=1), exact reciprocal ----
        m = jnp.max(scores, axis=-1, keepdims=True)
        e = jnp.exp(scores - m)
        denom = jnp.sum(e, axis=-1, keepdims=True)
        probs = e * pl.reciprocal(denom, approx=False)

        # ---- single lane-dense store: [probs | h_new | zeros] ----
        out_ref[b] = jnp.concatenate(
            [probs, h_new, jnp.zeros((B, pad), jnp.float32)], axis=-1)


def policy_forward_pallas(x_stack, h_stack, wslab, bslab, *, gru_size,
                          hidden_size, action_space):
    """x_stack: (4, B, 2G); h_stack: (4, 1, G) (start=True) or (4, B, G).

    Returns (probs (4, B, A), h_out (4, B, G)); index i corresponds to
    (softmax(action_scores_{i+1}), h{i+1}_out) of the PyTorch module.
    """
    n_branch, B, _ = x_stack.shape
    G, H, A = gru_size, hidden_size, action_space
    out_width = 4 * G                              # 128 for G=32 (lane-dense)
    assert out_width % 128 == 0 and A + G <= out_width

    # Host-side: concatenate [x | h] once (no in-kernel broadcast_in_dim).
    h_b = jnp.broadcast_to(h_stack.astype(jnp.float32), (n_branch, B, G))
    xh = jnp.concatenate([x_stack.astype(jnp.float32), h_b], axis=-1)

    kernel = functools.partial(_policy_kernel, gru_size=G, hidden_size=H,
                               action_space=A, out_width=out_width)
    vmem = pl.BlockSpec(memory_space=pltpu.MemorySpace.VMEM)

    out = pl.pallas_call(
        kernel,
        out_shape=jax.ShapeDtypeStruct((n_branch, B, out_width), jnp.float32),
        in_specs=[vmem, vmem, vmem],
        out_specs=vmem,
    )(xh, wslab, bslab)

    probs = out[:, :, :A]
    h_out = out[:, :, A:A + G]
    return probs, h_out


# ----------------------------------------------------------------------------
# Parameter handling
# ----------------------------------------------------------------------------

def init_torch_like_params(key, *, gru_size, hidden_size, action_space):
    """Synthetic parameters in PyTorch layout, stacked over the 4 branches."""
    G, H, A = gru_size, hidden_size, action_space
    ks = jax.random.split(key, 9)

    def u(k, shape, bound):
        return jax.random.uniform(k, shape, jnp.float32, -bound, bound)

    gb = 1.0 / math.sqrt(G)
    weight_ih = u(ks[0], (4, 3 * G, 2 * G), gb)   # GRUCell.weight_ih, rows [r; z; n]
    weight_hh = u(ks[1], (4, 3 * G, G), gb)       # GRUCell.weight_hh
    bias_ih = u(ks[2], (4, 3 * G), gb)
    bias_hh = u(ks[3], (4, 3 * G), gb)

    w1 = u(ks[4], (4, H, G), 1.0 / math.sqrt(G))  # linear1x.weight
    b1 = u(ks[5], (4, H), 1.0 / math.sqrt(G))
    w2 = u(ks[6], (4, A, H), 1.0 / math.sqrt(H))  # linear2x.weight
    b2 = u(ks[7], (4, A), 1.0 / math.sqrt(H))

    xavier_std = math.sqrt(2.0 / (G + 1))         # xavier_normal_ on (1, G)
    h_init = jax.random.normal(ks[8], (4, 1, G), jnp.float32) * xavier_std

    return (weight_ih, weight_hh, bias_ih, bias_hh, w1, b1, w2, b2), h_init


def pack_params(torch_params, *, gru_size, hidden_size, action_space):
    """PyTorch-layout params -> two lane-dense slabs (bf16 weights, f32 biases)."""
    G, H, A = gru_size, hidden_size, action_space
    weight_ih, weight_hh, bias_ih, bias_hh, w1, b1, w2, b2 = torch_params
    nb = weight_ih.shape[0]
    lanes = 4 * G

    def gate(w, g):
        return jnp.transpose(w[:, g * G:(g + 1) * G, :], (0, 2, 1))

    w_ir, w_iz, w_in = (gate(weight_ih, g) for g in range(3))   # (nb, 2G, G)
    w_hr, w_hz, w_hn = (gate(weight_hh, g) for g in range(3))   # (nb,  G, G)

    top = jnp.concatenate(                                       # x-rows
        [w_ir, w_iz, w_in, jnp.zeros((nb, 2 * G, G), jnp.float32)], axis=-1)
    bot = jnp.concatenate(                                       # h-rows
        [w_hr, w_hz, jnp.zeros((nb, G, G), jnp.float32), w_hn], axis=-1)
    w_cat = jnp.concatenate([top, bot], axis=1)                  # (nb, 3G, 4G)

    w1_t = jnp.transpose(w1, (0, 2, 1))                          # (nb, G, H)
    w2_t = jnp.transpose(w2, (0, 2, 1))                          # (nb, H, A)
    w1_p = jnp.pad(w1_t, ((0, 0), (0, 0), (0, lanes - H)))
    w2_p = jnp.pad(w2_t, ((0, 0), (0, 0), (0, lanes - A)))
    wslab = jnp.concatenate([w_cat, w1_p, w2_p], axis=1).astype(jnp.bfloat16)

    # fold b_hr into b_ir and b_hz into b_iz; b_hn stays in its own column block
    b_r = bias_ih[:, 0:G] + bias_hh[:, 0:G]
    b_z = bias_ih[:, G:2 * G] + bias_hh[:, G:2 * G]
    b_in = bias_ih[:, 2 * G:3 * G]
    b_hn = bias_hh[:, 2 * G:3 * G]
    b_cat = jnp.concatenate([b_r, b_z, b_in, b_hn], axis=-1)      # (nb, 4G)
    b1_p = jnp.pad(b1, ((0, 0), (0, lanes - H)))
    b2_p = jnp.pad(b2, ((0, 0), (0, lanes - A)))
    bslab = jnp.stack([b_cat, b1_p, b2_p], axis=1).astype(jnp.float32)
    return wslab, bslab


def reference_forward(x_stack, h_stack, torch_params, gru_size):
    """Pure-JAX f32 reference on PyTorch-layout params (validates packing too)."""
    G = gru_size
    weight_ih, weight_hh, bias_ih, bias_hh, w1, b1, w2, b2 = torch_params
    B = x_stack.shape[1]
    h = jnp.broadcast_to(h_stack, (4, B, G))
    gi = jnp.einsum('nbi,ngi->nbg', x_stack, weight_ih) + bias_ih[:, None, :]
    gh = jnp.einsum('nbh,ngh->nbg', h, weight_hh) + bias_hh[:, None, :]
    r = jax.nn.sigmoid(gi[..., :G] + gh[..., :G])
    z = jax.nn.sigmoid(gi[..., G:2 * G] + gh[..., G:2 * G])
    n = jnp.tanh(gi[..., 2 * G:] + r * gh[..., 2 * G:])
    h_new = (1 - z) * n + z * h
    a1 = jax.nn.relu(jnp.einsum('nbg,nhg->nbh', h_new, w1) + b1[:, None, :])
    sc = jnp.einsum('nbh,nah->nba', a1, w2) + b2[:, None, :]
    return jax.nn.softmax(sc, axis=-1), h_new


if __name__ == "__main__":
    # Small shapes consistent with the module's forward:
    batch_size = 8
    gru_size = 32
    hidden_size = 32
    action_space = 8

    key = jax.random.PRNGKey(0)
    kp, kx = jax.random.split(key)
    torch_params, h_param = init_torch_like_params(
        kp, gru_size=gru_size, hidden_size=hidden_size,
        action_space=action_space)
    wslab, bslab = pack_params(torch_params, gru_size=gru_size,
                               hidden_size=hidden_size,
                               action_space=action_space)

    # inputs1..inputs4: each (batch, 2*gru_size); stacked -> (4, B, 2G)
    x_stack = jax.random.normal(kx, (4, batch_size, 2 * gru_size), jnp.float32)

    # start=True branch: pass the learned (4, 1, G) state
    probs, h_out = policy_forward_pallas(
        x_stack, h_param, wslab, bslab,
        gru_size=gru_size, hidden_size=hidden_size, action_space=action_space)
    jax.block_until_ready((probs, h_out))

    probs_ref, h_ref = reference_forward(x_stack, h_param, torch_params,
                                         gru_size)
    # bf16 matmul operands (f32 accumulate) -> loose tolerances vs f32 reference
    assert jnp.allclose(h_out, h_ref, atol=2e-2, rtol=2e-2)
    assert jnp.allclose(probs, probs_ref, atol=2e-2, rtol=2e-2)
    # exact-reciprocal softmax: rows normalize tightly
    assert jnp.allclose(jnp.sum(probs, axis=-1), 1.0, atol=1e-3)

    # probs[i], h_out[i] correspond to (softmax(action_scores_{i+1}), h{i+1}_out)
    print("KERNEL_OK")
</pallas_src>

<mosaic_0001>
module attributes {stable_mosaic.version = 11 : i64} {
  func.func @_policy_kernel(%arg0: memref<4x8x96xf32, #tpu.memory_space<vmem>>, %arg1: memref<4x160x128xbf16, #tpu.memory_space<vmem>>, %arg2: memref<4x3x128xf32, #tpu.memory_space<vmem>>, %arg3: memref<4x8x128xf32, #tpu.memory_space<vmem>>) attributes {dimension_semantics = [], scalar_prefetch = 0 : i64, scratch_operands = 0 : i64, tpu.core_type = #tpu.core_type<tc>} {
    %c0 = arith.constant 0 : index
    %c0_0 = arith.constant 0 : index
    %c0_1 = arith.constant 0 : index
    %0 = vector.load %arg0[%c0, %c0_0, %c0_1] : memref<4x8x96xf32, #tpu.memory_space<vmem>>, vector<1x8x96xf32>
    %1 = vector.shape_cast %0 : vector<1x8x96xf32> to vector<8x96xf32>
    %2 = vector.extract_strided_slice %1 {offsets = [0, 64], sizes = [8, 32], strides = [1, 1]} : vector<8x96xf32> to vector<8x32xf32>
    %3 = arith.truncf %1 : vector<8x96xf32> to vector<8x96xbf16>
    %c0_2 = arith.constant 0 : index
    %c0_3 = arith.constant 0 : index
    %c0_4 = arith.constant 0 : index
    %4 = vector.load %arg1[%c0_2, %c0_3, %c0_4] : memref<4x160x128xbf16, #tpu.memory_space<vmem>>, vector<1x96x128xbf16>
    %5 = vector.shape_cast %4 : vector<1x96x128xbf16> to vector<96x128xbf16>
    %cst = arith.constant dense<0.000000e+00> : vector<8x128xf32>
    %6 = tpu.matmul %3, %5, %cst {dimension_numbers = #tpu.dot_dimension_numbers<[1], [0], [0], [1], [0, 0, 1, 1], [], []>} : vector<8x96xbf16>, vector<96x128xbf16>, vector<8x128xf32> -> vector<8x128xf32>
    %c0_5 = arith.constant 0 : index
    %c0_6 = arith.constant 0 : index
    %c0_7 = arith.constant 0 : index
    %7 = vector.load %arg2[%c0_5, %c0_6, %c0_7] : memref<4x3x128xf32, #tpu.memory_space<vmem>>, vector<1x1x128xf32>
    %8 = vector.shape_cast %7 : vector<1x1x128xf32> to vector<1x128xf32>
    %9 = vector.broadcast %8 : vector<1x128xf32> to vector<8x128xf32>
    %10 = arith.addf %6, %9 : vector<8x128xf32>
    %11 = vector.extract_strided_slice %10 {offsets = [0, 0], sizes = [8, 32], strides = [1, 1]} : vector<8x128xf32> to vector<8x32xf32>
    %12 = arith.negf %11 : vector<8x32xf32>
    %13 = math.exp %12 : vector<8x32xf32>
    %cst_8 = arith.constant 1.000000e+00 : f32
    %14 = vector.broadcast %cst_8 : f32 to vector<8x32xf32>
    %15 = arith.addf %14, %13 : vector<8x32xf32>
    %16 = arith.divf %14, %15 : vector<8x32xf32>
    %17 = vector.extract_strided_slice %10 {offsets = [0, 32], sizes = [8, 32], strides = [1, 1]} : vector<8x128xf32> to vector<8x32xf32>
    %18 = arith.negf %17 : vector<8x32xf32>
    %19 = math.exp %18 : vector<8x32xf32>
    %cst_9 = arith.constant 1.000000e+00 : f32
    %20 = vector.broadcast %cst_9 : f32 to vector<8x32xf32>
    %21 = arith.addf %20, %19 : vector<8x32xf32>
    %22 = arith.divf %20, %21 : vector<8x32xf32>
    %23 = vector.extract_strided_slice %10 {offsets = [0, 64], sizes = [8, 32], strides = [1, 1]} : vector<8x128xf32> to vector<8x32xf32>
    %24 = vector.extract_strided_slice %10 {offsets = [0, 96], sizes = [8, 32], strides = [1, 1]} : vector<8x128xf32> to vector<8x32xf32>
    %25 = arith.mulf %16, %24 : vector<8x32xf32>
    %26 = arith.addf %23, %25 : vector<8x32xf32>
    %27 = math.tanh %26 : vector<8x32xf32>
    %cst_10 = arith.constant 1.000000e+00 : f32
    %28 = vector.broadcast %cst_10 : f32 to vector<8x32xf32>
    %29 = arith.subf %28, %22 : vector<8x32xf32>
    %30 = arith.mulf %29, %27 : vector<8x32xf32>
    %31 = arith.mulf %22, %2 : vector<8x32xf32>
    %32 = arith.addf %30, %31 : vector<8x32xf32>
    %33 = arith.truncf %32 : vector<8x32xf32> to vector<8x32xbf16>
    %c0_11 = arith.constant 0 : index
    %c96 = arith.constant 96 : index
    %c0_12 = arith.constant 0 : index
    %34 = vector.load %arg1[%c0_11, %c96, %c0_12] : memref<4x160x128xbf16, #tpu.memory_space<vmem>>, vector<1x32x32xbf16>
    %35 = vector.shape_cast %34 : vector<1x32x32xbf16> to vector<32x32xbf16>
    %cst_13 = arith.constant dense<0.000000e+00> : vector<8x32xf32>
    %36 = tpu.matmul %33, %35, %cst_13 {dimension_numbers = #tpu.dot_dimension_numbers<[1], [0], [0], [1], [0, 0, 1, 1], [], []>} : vector<8x32xbf16>, vector<32x32xbf16>, vector<8x32xf32> -> vector<8x32xf32>
    %c0_14 = arith.constant 0 : index
    %c1 = arith.constant 1 : index
    %c0_15 = arith.constant 0 : index
    %37 = vector.load %arg2[%c0_14, %c1, %c0_15] : memref<4x3x128xf32, #tpu.memory_space<vmem>>, vector<1x1x32xf32>
    %38 = vector.shape_cast %37 : vector<1x1x32xf32> to vector<1x32xf32>
    %39 = vector.broadcast %38 : vector<1x32xf32> to vector<8x32xf32>
    %40 = arith.addf %36, %39 : vector<8x32xf32>
    %cst_16 = arith.constant 0.000000e+00 : f32
    %41 = vector.broadcast %cst_16 : f32 to vector<8x32xf32>
    %42 = arith.maximumf %40, %41 : vector<8x32xf32>
    %43 = arith.truncf %42 : vector<8x32xf32> to vector<8x32xbf16>
    %c0_17 = arith.constant 0 : index
    %c128 = arith.constant 128 : index
    %c0_18 = arith.constant 0 : index
    %44 = vector.load %arg1[%c0_17, %c128, %c0_18] : memref<4x160x128xbf16, #tpu.memory_space<vmem>>, vector<1x32x8xbf16>
    %45 = vector.shape_cast %44 : vector<1x32x8xbf16> to vector<32x8xbf16>
    %cst_19 = arith.constant dense<0.000000e+00> : vector<8x8xf32>
    %46 = tpu.matmul %43, %45, %cst_19 {dimension_numbers = #tpu.dot_dimension_numbers<[1], [0], [0], [1], [0, 0, 1, 1], [], []>} : vector<8x32xbf16>, vector<32x8xbf16>, vector<8x8xf32> -> vector<8x8xf32>
    %c0_20 = arith.constant 0 : index
    %c2 = arith.constant 2 : index
    %c0_21 = arith.constant 0 : index
    %47 = vector.load %arg2[%c0_20, %c2, %c0_21] : memref<4x3x128xf32, #tpu.memory_space<vmem>>, vector<1x1x8xf32>
    %48 = vector.shape_cast %47 : vector<1x1x8xf32> to vector<1x8xf32>
    %49 = vector.broadcast %48 : vector<1x8xf32> to vector<8x8xf32>
    %50 = arith.addf %46, %49 : vector<8x8xf32>
    %cst_22 = arith.constant dense<0xFF800000> : vector<8xf32>
    %51 = vector.multi_reduction <maximumf>, %50, %cst_22 [1] : vector<8x8xf32> to vector<8xf32>
    %52 = vector.shape_cast %51 : vector<8xf32> to vector<8x1xf32>
    %53 = vector.broadcast %52 : vector<8x1xf32> to vector<8x8xf32>
    %54 = arith.subf %50, %53 : vector<8x8xf32>
    %55 = math.exp %54 : vector<8x8xf32>
    %cst_23 = arith.constant dense<0.000000e+00> : vector<8xf32>
    %56 = vector.multi_reduction <add>, %55, %cst_23 [1] : vector<8x8xf32> to vector<8xf32>
    %57 = vector.shape_cast %56 : vector<8xf32> to vector<8x1xf32>
    %58 = tpu.reciprocal %57 : vector<8x1xf32> -> vector<8x1xf32>
    %59 = vector.broadcast %58 : vector<8x1xf32> to vector<8x8xf32>
    %60 = arith.mulf %55, %59 : vector<8x8xf32>
    %cst_24 = arith.constant 0.000000e+00 : f32
    %61 = vector.broadcast %cst_24 : f32 to vector<8x88xf32>
    %62 = tpu.concatenate %60, %32, %61 in 1 : vector<8x8xf32>, vector<8x32xf32>, vector<8x88xf32> -> vector<8x128xf32>
    %c0_25 = arith.constant 0 : index
    %c0_26 = arith.constant 0 : index
    %c0_27 = arith.constant 0 : index
    %63 = vector.load %arg3[%c0_25, %c0_26, %c0_27] : memref<4x8x128xf32, #tpu.memory_space<vmem>>, vector<1x8x128xf32>
    %64 = vector.shape_cast %63 : vector<1x8x128xf32> to vector<8x128xf32>
    %65 = vector.shape_cast %62 : vector<8x128xf32> to vector<1x8x128xf32>
    tpu.vector_store %arg3[%c0_25, %c0_26, %c0_27], %65 {strides = array<i32>} : memref<4x8x128xf32, #tpu.memory_space<vmem>>, vector<1x8x128xf32>,
    %c1_28 = arith.constant 1 : index
    %c0_29 = arith.constant 0 : index
    %c0_30 = arith.constant 0 : index
    %66 = vector.load %arg0[%c1_28, %c0_29, %c0_30] : memref<4x8x96xf32, #tpu.memory_space<vmem>>, vector<1x8x96xf32>
    %67 = vector.shape_cast %66 : vector<1x8x96xf32> to vector<8x96xf32>
    %68 = vector.extract_strided_slice %67 {offsets = [0, 64], sizes = [8, 32], strides = [1, 1]} : vector<8x96xf32> to vector<8x32xf32>
    %69 = arith.truncf %67 : vector<8x96xf32> to vector<8x96xbf16>
    %c1_31 = arith.constant 1 : index
    %c0_32 = arith.constant 0 : index
    %c0_33 = arith.constant 0 : index
    %70 = vector.load %arg1[%c1_31, %c0_32, %c0_33] : memref<4x160x128xbf16, #tpu.memory_space<vmem>>, vector<1x96x128xbf16>
    %71 = vector.shape_cast %70 : vector<1x96x128xbf16> to vector<96x128xbf16>
    %cst_34 = arith.constant dense<0.000000e+00> : vector<8x128xf32>
    %72 = tpu.matmul %69, %71, %cst_34 {dimension_numbers = #tpu.dot_dimension_numbers<[1], [0], [0], [1], [0, 0, 1, 1], [], []>} : vector<8x96xbf16>, vector<96x128xbf16>, vector<8x128xf32> -> vector<8x128xf32>
    %c1_35 = arith.constant 1 : index
    %c0_36 = arith.constant 0 : index
    %c0_37 = arith.constant 0 : index
    %73 = vector.load %arg2[%c1_35, %c0_36, %c0_37] : memref<4x3x128xf32, #tpu.memory_space<vmem>>, vector<1x1x128xf32>
    %74 = vector.shape_cast %73 : vector<1x1x128xf32> to vector<1x128xf32>
    %75 = vector.broadcast %74 : vector<1x128xf32> to vector<8x128xf32>
    %76 = arith.addf %72, %75 : vector<8x128xf32>
    %77 = vector.extract_strided_slice %76 {offsets = [0, 0], sizes = [8, 32], strides = [1, 1]} : vector<8x128xf32> to vector<8x32xf32>
    %78 = arith.negf %77 : vector<8x32xf32>
    %79 = math.exp %78 : vector<8x32xf32>
    %cst_38 = arith.constant 1.000000e+00 : f32
    %80 = vector.broadcast %cst_38 : f32 to vector<8x32xf32>
    %81 = arith.addf %80, %79 : vector<8x32xf32>
    %82 = arith.divf %80, %81 : vector<8x32xf32>
    %83 = vector.extract_strided_slice %76 {offsets = [0, 32], sizes = [8, 32], strides = [1, 1]} : vector<8x128xf32> to vector<8x32xf32>
    %84 = arith.negf %83 : vector<8x32xf32>
    %85 = math.exp %84 : vector<8x32xf32>
    %cst_39 = arith.constant 1.000000e+00 : f32
    %86 = vector.broadcast %cst_39 : f32 to vector<8x32xf32>
    %87 = arith.addf %86, %85 : vector<8x32xf32>
    %88 = arith.divf %86, %87 : vector<8x32xf32>
    %89 = vector.extract_strided_slice %76 {offsets = [0, 64], sizes = [8, 32], strides = [1, 1]} : vector<8x128xf32> to vector<8x32xf32>
    %90 = vector.extract_strided_slice %76 {offsets = [0, 96], sizes = [8, 32], strides = [1, 1]} : vector<8x128xf32> to vector<8x32xf32>
    %91 = arith.mulf %82, %90 : vector<8x32xf32>
    %92 = arith.addf %89, %91 : vector<8x32xf32>
    %93 = math.tanh %92 : vector<8x32xf32>
    %cst_40 = arith.constant 1.000000e+00 : f32
    %94 = vector.broadcast %cst_40 : f32 to vector<8x32xf32>
    %95 = arith.subf %94, %88 : vector<8x32xf32>
    %96 = arith.mulf %95, %93 : vector<8x32xf32>
    %97 = arith.mulf %88, %68 : vector<8x32xf32>
    %98 = arith.addf %96, %97 : vector<8x32xf32>
    %99 = arith.truncf %98 : vector<8x32xf32> to vector<8x32xbf16>
    %c1_41 = arith.constant 1 : index
    %c96_42 = arith.constant 96 : index
    %c0_43 = arith.constant 0 : index
    %100 = vector.load %arg1[%c1_41, %c96_42, %c0_43] : memref<4x160x128xbf16, #tpu.memory_space<vmem>>, vector<1x32x32xbf16>
    %101 = vector.shape_cast %100 : vector<1x32x32xbf16> to vector<32x32xbf16>
    %cst_44 = arith.constant dense<0.000000e+00> : vector<8x32xf32>
    %102 = tpu.matmul %99, %101, %cst_44 {dimension_numbers = #tpu.dot_dimension_numbers<[1], [0], [0], [1], [0, 0, 1, 1], [], []>} : vector<8x32xbf16>, vector<32x32xbf16>, vector<8x32xf32> -> vector<8x32xf32>
    %c1_45 = arith.constant 1 : index
    %c1_46 = arith.constant 1 : index
    %c0_47 = arith.constant 0 : index
    %103 = vector.load %arg2[%c1_45, %c1_46, %c0_47] : memref<4x3x128xf32, #tpu.memory_space<vmem>>, vector<1x1x32xf32>
    %104 = vector.shape_cast %103 : vector<1x1x32xf32> to vector<1x32xf32>
    %105 = vector.broadcast %104 : vector<1x32xf32> to vector<8x32xf32>
    %106 = arith.addf %102, %105 : vector<8x32xf32>
    %cst_48 = arith.constant 0.000000e+00 : f32
    %107 = vector.broadcast %cst_48 : f32 to vector<8x32xf32>
    %108 = arith.maximumf %106, %107 : vector<8x32xf32>
    %109 = arith.truncf %108 : vector<8x32xf32> to vector<8x32xbf16>
    %c1_49 = arith.constant 1 : index
    %c128_50 = arith.constant 128 : index
    %c0_51 = arith.constant 0 : index
    %110 = vector.load %arg1[%c1_49, %c128_50, %c0_51] : memref<4x160x128xbf16, #tpu.memory_space<vmem>>, vector<1x32x8xbf16>
    %111 = vector.shape_cast %110 : vector<1x32x8xbf16> to vector<32x8xbf16>
    %cst_52 = arith.constant dense<0.000000e+00> : vector<8x8xf32>
    %112 = tpu.matmul %109, %111, %cst_52 {dimension_numbers = #tpu.dot_dimension_numbers<[1], [0], [0], [1], [0, 0, 1, 1], [], []>} : vector<8x32xbf16>, vector<32x8xbf16>, vector<8x8xf32> -> vector<8x8xf32>
    %c1_53 = arith.constant 1 : index
    %c2_54 = arith.constant 2 : index
    %c0_55 = arith.constant 0 : index
    %113 = vector.load %arg2[%c1_53, %c2_54, %c0_55] : memref<4x3x128xf32, #tpu.memory_space<vmem>>, vector<1x1x8xf32>
    %114 = vector.shape_cast %113 : vector<1x1x8xf32> to vector<1x8xf32>
    %115 = vector.broadcast %114 : vector<1x8xf32> to vector<8x8xf32>
    %116 = arith.addf %112, %115 : vector<8x8xf32>
    %cst_56 = arith.constant dense<0xFF800000> : vector<8xf32>
    %117 = vector.multi_reduction <maximumf>, %116, %cst_56 [1] : vector<8x8xf32> to vector<8xf32>
    %118 = vector.shape_cast %117 : vector<8xf32> to vector<8x1xf32>
    %119 = vector.broadcast %118 : vector<8x1xf32> to vector<8x8xf32>
    %120 = arith.subf %116, %119 : vector<8x8xf32>
    %121 = math.exp %120 : vector<8x8xf32>
    %cst_57 = arith.constant dense<0.000000e+00> : vector<8xf32>
    %122 = vector.multi_reduction <add>, %121, %cst_57 [1] : vector<8x8xf32> to vector<8xf32>
    %123 = vector.shape_cast %122 : vector<8xf32> to vector<8x1xf32>
    %124 = tpu.reciprocal %123 : vector<8x1xf32> -> vector<8x1xf32>
    %125 = vector.broadcast %124 : vector<8x1xf32> to vector<8x8xf32>
    %126 = arith.mulf %121, %125 : vector<8x8xf32>
    %cst_58 = arith.constant 0.000000e+00 : f32
    %127 = vector.broadcast %cst_58 : f32 to vector<8x88xf32>
    %128 = tpu.concatenate %126, %98, %127 in 1 : vector<8x8xf32>, vector<8x32xf32>, vector<8x88xf32> -> vector<8x128xf32>
    %c1_59 = arith.constant 1 : index
    %c0_60 = arith.constant 0 : index
    %c0_61 = arith.constant 0 : index
    %129 = vector.load %arg3[%c1_59, %c0_60, %c0_61] : memref<4x8x128xf32, #tpu.memory_space<vmem>>, vector<1x8x128xf32>
    %130 = vector.shape_cast %129 : vector<1x8x128xf32> to vector<8x128xf32>
    %131 = vector.shape_cast %128 : vector<8x128xf32> to vector<1x8x128xf32>
    tpu.vector_store %arg3[%c1_59, %c0_60, %c0_61], %131 {strides = array<i32>} : memref<4x8x128xf32, #tpu.memory_space<vmem>>, vector<1x8x128xf32>,
    %c2_62 = arith.constant 2 : index
    %c0_63 = arith.constant 0 : index
    %c0_64 = arith.constant 0 : index
    %132 = vector.load %arg0[%c2_62, %c0_63, %c0_64] : memref<4x8x96xf32, #tpu.memory_space<vmem>>, vector<1x8x96xf32>
    %133 = vector.shape_cast %132 : vector<1x8x96xf32> to vector<8x96xf32>
    %134 = vector.extract_strided_slice %133 {offsets = [0, 64], sizes = [8, 32], strides = [1, 1]} : vector<8x96xf32> to vector<8x32xf32>
    %135 = arith.truncf %133 : vector<8x96xf32> to vector<8x96xbf16>
    %c2_65 = arith.constant 2 : index
    %c0_66 = arith.constant 0 : index
    %c0_67 = arith.constant 0 : index
    %136 = vector.load %arg1[%c2_65, %c0_66, %c0_67] : memref<4x160x128xbf16, #tpu.memory_space<vmem>>, vector<1x96x128xbf16>
    %137 = vector.shape_cast %136 : vector<1x96x128xbf16> to vector<96x128xbf16>
    %cst_68 = arith.constant dense<0.000000e+00> : vector<8x128xf32>
    %138 = tpu.matmul %135, %137, %cst_68 {dimension_numbers = #tpu.dot_dimension_numbers<[1], [0], [0], [1], [0, 0, 1, 1], [], []>} : vector<8x96xbf16>, vector<96x128xbf16>, vector<8x128xf32> -> vector<8x128xf32>
    %c2_69 = arith.constant 2 : index
    %c0_70 = arith.constant 0 : index
    %c0_71 = arith.constant 0 : index
    %139 = vector.load %arg2[%c2_69, %c0_70, %c0_71] : memref<4x3x128xf32, #tpu.memory_space<vmem>>, vector<1x1x128xf32>
    %140 = vector.shape_cast %139 : vector<1x1x128xf32> to vector<1x128xf32>
    %141 = vector.broadcast %140 : vector<1x128xf32> to vector<8x128xf32>
    %142 = arith.addf %138, %141 : vector<8x128xf32>
    %143 = vector.extract_strided_slice %142 {offsets = [0, 0], sizes = [8, 32], strides = [1, 1]} : vector<8x128xf32> to vector<8x32xf32>
    %144 = arith.negf %143 : vector<8x32xf32>
    %145 = math.exp %144 : vector<8x32xf32>
    %cst_72 = arith.constant 1.000000e+00 : f32
    %146 = vector.broadcast %cst_72 : f32 to vector<8x32xf32>
    %147 = arith.addf %146, %145 : vector<8x32xf32>
    %148 = arith.divf %146, %147 : vector<8x32xf32>
    %149 = vector.extract_strided_slice %142 {offsets = [0, 32], sizes = [8, 32], strides = [1, 1]} : vector<8x128xf32> to vector<8x32xf32>
    %150 = arith.negf %149 : vector<8x32xf32>
    %151 = math.exp %150 : vector<8x32xf32>
    %cst_73 = arith.constant 1.000000e+00 : f32
    %152 = vector.broadcast %cst_73 : f32 to vector<8x32xf32>
    %153 = arith.addf %152, %151 : vector<8x32xf32>
    %154 = arith.divf %152, %153 : vector<8x32xf32>
    %155 = vector.extract_strided_slice %142 {offsets = [0, 64], sizes = [8, 32], strides = [1, 1]} : vector<8x128xf32> to vector<8x32xf32>
    %156 = vector.extract_strided_slice %142 {offsets = [0, 96], sizes = [8, 32], strides = [1, 1]} : vector<8x128xf32> to vector<8x32xf32>
    %157 = arith.mulf %148, %156 : vector<8x32xf32>
    %158 = arith.addf %155, %157 : vector<8x32xf32>
    %159 = math.tanh %158 : vector<8x32xf32>
    %cst_74 = arith.constant 1.000000e+00 : f32
    %160 = vector.broadcast %cst_74 : f32 to vector<8x32xf32>
    %161 = arith.subf %160, %154 : vector<8x32xf32>
    %162 = arith.mulf %161, %159 : vector<8x32xf32>
    %163 = arith.mulf %154, %134 : vector<8x32xf32>
    %164 = arith.addf %162, %163 : vector<8x32xf32>
    %165 = arith.truncf %164 : vector<8x32xf32> to vector<8x32xbf16>
    %c2_75 = arith.constant 2 : index
    %c96_76 = arith.constant 96 : index
    %c0_77 = arith.constant 0 : index
    %166 = vector.load %arg1[%c2_75, %c96_76, %c0_77] : memref<4x160x128xbf16, #tpu.memory_space<vmem>>, vector<1x32x32xbf16>
    %167 = vector.shape_cast %166 : vector<1x32x32xbf16> to vector<32x32xbf16>
    %cst_78 = arith.constant dense<0.000000e+00> : vector<8x32xf32>
    %168 = tpu.matmul %165, %167, %cst_78 {dimension_numbers = #tpu.dot_dimension_numbers<[1], [0], [0], [1], [0, 0, 1, 1], [], []>} : vector<8x32xbf16>, vector<32x32xbf16>, vector<8x32xf32> -> vector<8x32xf32>
    %c2_79 = arith.constant 2 : index
    %c1_80 = arith.constant 1 : index
    %c0_81 = arith.constant 0 : index
    %169 = vector.load %arg2[%c2_79, %c1_80, %c0_81] : memref<4x3x128xf32, #tpu.memory_space<vmem>>, vector<1x1x32xf32>
    %170 = vector.shape_cast %169 : vector<1x1x32xf32> to vector<1x32xf32>
    %171 = vector.broadcast %170 : vector<1x32xf32> to vector<8x32xf32>
    %172 = arith.addf %168, %171 : vector<8x32xf32>
    %cst_82 = arith.constant 0.000000e+00 : f32
    %173 = vector.broadcast %cst_82 : f32 to vector<8x32xf32>
    %174 = arith.maximumf %172, %173 : vector<8x32xf32>
    %175 = arith.truncf %174 : vector<8x32xf32> to vector<8x32xbf16>
    %c2_83 = arith.constant 2 : index
    %c128_84 = arith.constant 128 : index
    %c0_85 = arith.constant 0 : index
    %176 = vector.load %arg1[%c2_83, %c128_84, %c0_85] : memref<4x160x128xbf16, #tpu.memory_space<vmem>>, vector<1x32x8xbf16>
    %177 = vector.shape_cast %176 : vector<1x32x8xbf16> to vector<32x8xbf16>
    %cst_86 = arith.constant dense<0.000000e+00> : vector<8x8xf32>
    %178 = tpu.matmul %175, %177, %cst_86 {dimension_numbers = #tpu.dot_dimension_numbers<[1], [0], [0], [1], [0, 0, 1, 1], [], []>} : vector<8x32xbf16>, vector<32x8xbf16>, vector<8x8xf32> -> vector<8x8xf32>
    %c2_87 = arith.constant 2 : index
    %c2_88 = arith.constant 2 : index
    %c0_89 = arith.constant 0 : index
    %179 = vector.load %arg2[%c2_87, %c2_88, %c0_89] : memref<4x3x128xf32, #tpu.memory_space<vmem>>, vector<1x1x8xf32>
    %180 = vector.shape_cast %179 : vector<1x1x8xf32> to vector<1x8xf32>
    %181 = vector.broadcast %180 : vector<1x8xf32> to vector<8x8xf32>
    %182 = arith.addf %178, %181 : vector<8x8xf32>
    %cst_90 = arith.constant dense<0xFF800000> : vector<8xf32>
    %183 = vector.multi_reduction <maximumf>, %182, %cst_90 [1] : vector<8x8xf32> to vector<8xf32>
    %184 = vector.shape_cast %183 : vector<8xf32> to vector<8x1xf32>
    %185 = vector.broadcast %184 : vector<8x1xf32> to vector<8x8xf32>
    %186 = arith.subf %182, %185 : vector<8x8xf32>
    %187 = math.exp %186 : vector<8x8xf32>
    %cst_91 = arith.constant dense<0.000000e+00> : vector<8xf32>
    %188 = vector.multi_reduction <add>, %187, %cst_91 [1] : vector<8x8xf32> to vector<8xf32>
    %189 = vector.shape_cast %188 : vector<8xf32> to vector<8x1xf32>
    %190 = tpu.reciprocal %189 : vector<8x1xf32> -> vector<8x1xf32>
    %191 = vector.broadcast %190 : vector<8x1xf32> to vector<8x8xf32>
    %192 = arith.mulf %187, %191 : vector<8x8xf32>
    %cst_92 = arith.constant 0.000000e+00 : f32
    %193 = vector.broadcast %cst_92 : f32 to vector<8x88xf32>
    %194 = tpu.concatenate %192, %164, %193 in 1 : vector<8x8xf32>, vector<8x32xf32>, vector<8x88xf32> -> vector<8x128xf32>
    %c2_93 = arith.constant 2 : index
    %c0_94 = arith.constant 0 : index
    %c0_95 = arith.constant 0 : index
    %195 = vector.load %arg3[%c2_93, %c0_94, %c0_95] : memref<4x8x128xf32, #tpu.memory_space<vmem>>, vector<1x8x128xf32>
    %196 = vector.shape_cast %195 : vector<1x8x128xf32> to vector<8x128xf32>
    %197 = vector.shape_cast %194 : vector<8x128xf32> to vector<1x8x128xf32>
    tpu.vector_store %arg3[%c2_93, %c0_94, %c0_95], %197 {strides = array<i32>} : memref<4x8x128xf32, #tpu.memory_space<vmem>>, vector<1x8x128xf32>,
    %c3 = arith.constant 3 : index
    %c0_96 = arith.constant 0 : index
    %c0_97 = arith.constant 0 : index
    %198 = vector.load %arg0[%c3, %c0_96, %c0_97] : memref<4x8x96xf32, #tpu.memory_space<vmem>>, vector<1x8x96xf32>
    %199 = vector.shape_cast %198 : vector<1x8x96xf32> to vector<8x96xf32>
    %200 = vector.extract_strided_slice %199 {offsets = [0, 64], sizes = [8, 32], strides = [1, 1]} : vector<8x96xf32> to vector<8x32xf32>
    %201 = arith.truncf %199 : vector<8x96xf32> to vector<8x96xbf16>
    %c3_98 = arith.constant 3 : index
    %c0_99 = arith.constant 0 : index
    %c0_100 = arith.constant 0 : index
    %202 = vector.load %arg1[%c3_98, %c0_99, %c0_100] : memref<4x160x128xbf16, #tpu.memory_space<vmem>>, vector<1x96x128xbf16>
    %203 = vector.shape_cast %202 : vector<1x96x128xbf16> to vector<96x128xbf16>
    %cst_101 = arith.constant dense<0.000000e+00> : vector<8x128xf32>
    %204 = tpu.matmul %201, %203, %cst_101 {dimension_numbers = #tpu.dot_dimension_numbers<[1], [0], [0], [1], [0, 0, 1, 1], [], []>} : vector<8x96xbf16>, vector<96x128xbf16>, vector<8x128xf32> -> vector<8x128xf32>
    %c3_102 = arith.constant 3 : index
    %c0_103 = arith.constant 0 : index
    %c0_104 = arith.constant 0 : index
    %205 = vector.load %arg2[%c3_102, %c0_103, %c0_104] : memref<4x3x128xf32, #tpu.memory_space<vmem>>, vector<1x1x128xf32>
    %206 = vector.shape_cast %205 : vector<1x1x128xf32> to vector<1x128xf32>
    %207 = vector.broadcast %206 : vector<1x128xf32> to vector<8x128xf32>
    %208 = arith.addf %204, %207 : vector<8x128xf32>
    %209 = vector.extract_strided_slice %208 {offsets = [0, 0], sizes = [8, 32], strides = [1, 1]} : vector<8x128xf32> to vector<8x32xf32>
    %210 = arith.negf %209 : vector<8x32xf32>
    %211 = math.exp %210 : vector<8x32xf32>
    %cst_105 = arith.constant 1.000000e+00 : f32
    %212 = vector.broadcast %cst_105 : f32 to vector<8x32xf32>
    %213 = arith.addf %212, %211 : vector<8x32xf32>
    %214 = arith.divf %212, %213 : vector<8x32xf32>
    %215 = vector.extract_strided_slice %208 {offsets = [0, 32], sizes = [8, 32], strides = [1, 1]} : vector<8x128xf32> to vector<8x32xf32>
    %216 = arith.negf %215 : vector<8x32xf32>
    %217 = math.exp %216 : vector<8x32xf32>
    %cst_106 = arith.constant 1.000000e+00 : f32
    %218 = vector.broadcast %cst_106 : f32 to vector<8x32xf32>
    %219 = arith.addf %218, %217 : vector<8x32xf32>
    %220 = arith.divf %218, %219 : vector<8x32xf32>
    %221 = vector.extract_strided_slice %208 {offsets = [0, 64], sizes = [8, 32], strides = [1, 1]} : vector<8x128xf32> to vector<8x32xf32>
    %222 = vector.extract_strided_slice %208 {offsets = [0, 96], sizes = [8, 32], strides = [1, 1]} : vector<8x128xf32> to vector<8x32xf32>
    %223 = arith.mulf %214, %222 : vector<8x32xf32>
    %224 = arith.addf %221, %223 : vector<8x32xf32>
    %225 = math.tanh %224 : vector<8x32xf32>
    %cst_107 = arith.constant 1.000000e+00 : f32
    %226 = vector.broadcast %cst_107 : f32 to vector<8x32xf32>
    %227 = arith.subf %226, %220 : vector<8x32xf32>
    %228 = arith.mulf %227, %225 : vector<8x32xf32>
    %229 = arith.mulf %220, %200 : vector<8x32xf32>
    %230 = arith.addf %228, %229 : vector<8x32xf32>
    %231 = arith.truncf %230 : vector<8x32xf32> to vector<8x32xbf16>
    %c3_108 = arith.constant 3 : index
    %c96_109 = arith.constant 96 : index
    %c0_110 = arith.constant 0 : index
    %232 = vector.load %arg1[%c3_108, %c96_109, %c0_110] : memref<4x160x128xbf16, #tpu.memory_space<vmem>>, vector<1x32x32xbf16>
    %233 = vector.shape_cast %232 : vector<1x32x32xbf16> to vector<32x32xbf16>
    %cst_111 = arith.constant dense<0.000000e+00> : vector<8x32xf32>
    %234 = tpu.matmul %231, %233, %cst_111 {dimension_numbers = #tpu.dot_dimension_numbers<[1], [0], [0], [1], [0, 0, 1, 1], [], []>} : vector<8x32xbf16>, vector<32x32xbf16>, vector<8x32xf32> -> vector<8x32xf32>
    %c3_112 = arith.constant 3 : index
    %c1_113 = arith.constant 1 : index
    %c0_114 = arith.constant 0 : index
    %235 = vector.load %arg2[%c3_112, %c1_113, %c0_114] : memref<4x3x128xf32, #tpu.memory_space<vmem>>, vector<1x1x32xf32>
    %236 = vector.shape_cast %235 : vector<1x1x32xf32> to vector<1x32xf32>
    %237 = vector.broadcast %236 : vector<1x32xf32> to vector<8x32xf32>
    %238 = arith.addf %234, %237 : vector<8x32xf32>
    %cst_115 = arith.constant 0.000000e+00 : f32
    %239 = vector.broadcast %cst_115 : f32 to vector<8x32xf32>
    %240 = arith.maximumf %238, %239 : vector<8x32xf32>
    %241 = arith.truncf %240 : vector<8x32xf32> to vector<8x32xbf16>
    %c3_116 = arith.constant 3 : index
    %c128_117 = arith.constant 128 : index
    %c0_118 = arith.constant 0 : index
    %242 = vector.load %arg1[%c3_116, %c128_117, %c0_118] : memref<4x160x128xbf16, #tpu.memory_space<vmem>>, vector<1x32x8xbf16>
    %243 = vector.shape_cast %242 : vector<1x32x8xbf16> to vector<32x8xbf16>
    %cst_119 = arith.constant dense<0.000000e+00> : vector<8x8xf32>
    %244 = tpu.matmul %241, %243, %cst_119 {dimension_numbers = #tpu.dot_dimension_numbers<[1], [0], [0], [1], [0, 0, 1, 1], [], []>} : vector<8x32xbf16>, vector<32x8xbf16>, vector<8x8xf32> -> vector<8x8xf32>
    %c3_120 = arith.constant 3 : index
    %c2_121 = arith.constant 2 : index
    %c0_122 = arith.constant 0 : index
    %245 = vector.load %arg2[%c3_120, %c2_121, %c0_122] : memref<4x3x128xf32, #tpu.memory_space<vmem>>, vector<1x1x8xf32>
    %246 = vector.shape_cast %245 : vector<1x1x8xf32> to vector<1x8xf32>
    %247 = vector.broadcast %246 : vector<1x8xf32> to vector<8x8xf32>
    %248 = arith.addf %244, %247 : vector<8x8xf32>
    %cst_123 = arith.constant dense<0xFF800000> : vector<8xf32>
    %249 = vector.multi_reduction <maximumf>, %248, %cst_123 [1] : vector<8x8xf32> to vector<8xf32>
    %250 = vector.shape_cast %249 : vector<8xf32> to vector<8x1xf32>
    %251 = vector.broadcast %250 : vector<8x1xf32> to vector<8x8xf32>
    %252 = arith.subf %248, %251 : vector<8x8xf32>
    %253 = math.exp %252 : vector<8x8xf32>
    %cst_124 = arith.constant dense<0.000000e+00> : vector<8xf32>
    %254 = vector.multi_reduction <add>, %253, %cst_124 [1] : vector<8x8xf32> to vector<8xf32>
    %255 = vector.shape_cast %254 : vector<8xf32> to vector<8x1xf32>
    %256 = tpu.reciprocal %255 : vector<8x1xf32> -> vector<8x1xf32>
    %257 = vector.broadcast %256 : vector<8x1xf32> to vector<8x8xf32>
    %258 = arith.mulf %253, %257 : vector<8x8xf32>
    %cst_125 = arith.constant 0.000000e+00 : f32
    %259 = vector.broadcast %cst_125 : f32 to vector<8x88xf32>
    %260 = tpu.concatenate %258, %230, %259 in 1 : vector<8x8xf32>, vector<8x32xf32>, vector<8x88xf32> -> vector<8x128xf32>
    %c3_126 = arith.constant 3 : index
    %c0_127 = arith.constant 0 : index
    %c0_128 = arith.constant 0 : index
    %261 = vector.load %arg3[%c3_126, %c0_127, %c0_128] : memref<4x8x128xf32, #tpu.memory_space<vmem>>, vector<1x8x128xf32>
    %262 = vector.shape_cast %261 : vector<1x8x128xf32> to vector<8x128xf32>
    %263 = vector.shape_cast %260 : vector<8x128xf32> to vector<1x8x128xf32>
    tpu.vector_store %arg3[%c3_126, %c0_127, %c0_128], %263 {strides = array<i32>} : memref<4x8x128xf32, #tpu.memory_space<vmem>>, vector<1x8x128xf32>,
    return
  }
}

</mosaic_0001>

<llo_original>
// kernel: tpu_custom_call.1
$region0: #{tpu_custom_call.1}
  #allocation0 [shape = 'u32[]', space=smem, size = 0x4, offset = 0x4, fixed_abs, tag = 'smem constant byte address 0x4 - core index']
  #allocation1 [shape = 'u32[144,128]{1,0:T(1,128)}', space=vmem, size = 0x12000, scoped, tag = 'internal scratch']
  %s0 = inlined_call_operand.hbm [shape: f32[4,8,96], index: 0, kind: input, shape index: {}]
  %s1 = inlined_call_operand.hbm [shape: bf16[4,160,128], index: 1, kind: input, shape index: {}]
  %s2 = inlined_call_operand.vmem [shape: f32[4,3,128], index: 2, kind: input, shape index: {}]
  %s3 = inlined_call_operand.hbm [shape: f32[4,8,128], index: 3, kind: output, shape index: {}]
  %s4 = sld [smem:[#allocation0]]
  $region30: #{tpu_custom_call.1} parent=0
    _
  %s6 = ssub.s32 1, %s4
  %s7 = scalar_select 0, %s6, %s4
  $region1: #{tpu_custom_call.1} parent=0
    #allocation2 [shape = 'u8[16384]{0}', space=vmem, size = 0x4000, scoped, tag = 'input window, operand 0, single buffered']
    #allocation3 [shape = 's32[1]{0}', space=sflag, size = 0x4, scoped, tag = 'scoped memory for tpu_custom_call.1']
    #allocation4 [shape = 's32[1]{0}', space=sflag, size = 0x4, scoped, tag = 'scoped memory for tpu_custom_call.1']
    #allocation5 [shape = 'u8[163840]{0}', space=vmem, size = 0x28000, scoped, tag = 'input window, operand 1, single buffered']
    #allocation6 [shape = 's32[1]{0}', space=sflag, size = 0x4, scoped, tag = 'scoped memory for tpu_custom_call.1']
    #allocation7 [shape = 'u8[16384]{0}', space=vmem, size = 0x4000, scoped, tag = 'output window, operand 0, single buffered']
    %8 = vsyncpa [#allocation3], 0
    %9 = vsyncpa [#allocation6], 0
    %10 = vsyncpa [#allocation4], 0
    // Predicated region
    $region2: #{tpu_custom_call.1} parent=1 // pred_check
      _
    $region3: #{tpu_custom_call.1} parent=1 // pred_check_branch
      %12 = sbr.rel (0) target = $region5
    $region4: #{tpu_custom_call.1} parent=1 // pred_region
      %s14 = ssub.s32 512, 512
      %15 = vsyncadd [#allocation3], %s14
      %s16 = sshll.u32 [#allocation2], 4
      %s17 = int_to_ptr.vmem [resolvable:$true] %s16
      %22 = dma.hbm_to_vmem [thread:$0]  %s0, 512, %s17, [#allocation3], 128, 128, 8
    $region5: #{tpu_custom_call.1} parent=1 // pred_fallthru
      _
    // Predicated region
    $region6: #{tpu_custom_call.1} parent=1 // pred_check
      _
    $region7: #{tpu_custom_call.1} parent=1 // pred_check_branch
      %24 = sbr.rel (0) target = $region9
    $region8: #{tpu_custom_call.1} parent=1 // pred_region
      %s26 = ssub.s32 5120, 5120
      %27 = vsyncadd [#allocation6], %s26
      %s28 = sshll.u32 [#allocation5], 4
      %s29 = int_to_ptr.vmem [resolvable:$true] %s28
      %34 = dma.hbm_to_vmem [thread:$0]  %s1, 5120, %s29, [#allocation6], 64, 64, 4
    $region9: #{tpu_custom_call.1} parent=1 // pred_fallthru
      _
    // Predicated region
    $region10: #{tpu_custom_call.1} parent=1 // pred_check
      _
    $region11: #{tpu_custom_call.1} parent=1 // pred_check_branch
      %36 = sbr.rel (0) target = $region13
    $region12: #{tpu_custom_call.1} parent=1 // pred_region
      _
    $region13: #{tpu_custom_call.1} parent=1 // pred_fallthru
      _
    // Predicated region
    $region14: #{tpu_custom_call.1} parent=1 // pred_check
      _
    $region15: #{tpu_custom_call.1} parent=1 // pred_check_branch
      %38 = sbr.rel (0) target = $region17
    $region16: #{tpu_custom_call.1} parent=1 // pred_region
      %39 = dma.done [#allocation3], 512
    $region17: #{tpu_custom_call.1} parent=1 // pred_fallthru
      _
    // Predicated region
    $region18: #{tpu_custom_call.1} parent=1 // pred_check
      _
    $region19: #{tpu_custom_call.1} parent=1 // pred_check_branch
      %41 = sbr.rel (0) target = $region21
    $region20: #{tpu_custom_call.1} parent=1 // pred_region
      %42 = dma.done [#allocation6], 5120
    $region21: #{tpu_custom_call.1} parent=1 // pred_fallthru
      _
    %v44 = vld [vmem:[#allocation2] sm:$0xff]
    %v45 = vpack.c.bf16 %v44, %v44
    %v46 = vld [vmem:[#allocation5] sm:$0xf]
    %v47 = vld [vmem:[#allocation5 + $0x4] sm:$0xf]
    %v48 = vld [vmem:[#allocation5 + $0x8] sm:$0xf]
    %v49 = vld [vmem:[#allocation5 + $0xc] sm:$0xf]
    %v50 = vld [vmem:[#allocation5 + $0x10] sm:$0xf]
    %v51 = vld [vmem:[#allocation5 + $0x14] sm:$0xf]
    %v52 = vld [vmem:[#allocation5 + $0x18] sm:$0xf]
    %v53 = vld [vmem:[#allocation5 + $0x1c] sm:$0xf]
    %v54 = vld [vmem:[#allocation5 + $0x20] sm:$0xf]
    %v55 = vld [vmem:[#allocation5 + $0x24] sm:$0xf]
    %v56 = vld [vmem:[#allocation5 + $0x28] sm:$0xf]
    %v57 = vld [vmem:[#allocation5 + $0x2c] sm:$0xf]
    %v58 = vld [vmem:[%s2] sm:$0x1]
    %v59 = vlaneseq
    %v60 = vshrl.u32 %v59, 7
    %v61 = vsub.s32 0, %v60
    %v62 = vrot.slane %v58, %v61
    %v75 = vunpack.c.l.b16 %v46
    %v76 = vunpack.c.l.b16 %v47
    %v77 = vunpack.c.l.b16 %v48
    %v78 = vunpack.c.l.b16 %v49
    %v79 = vunpack.c.l.b16 %v50
    %v80 = vunpack.c.l.b16 %v51
    %v81 = vunpack.c.l.b16 %v52
    %v82 = vunpack.c.l.b16 %v53
    %v83 = vunpack.c.l.b16 %v54
    %v84 = vunpack.c.l.b16 %v55
    %v85 = vunpack.c.l.b16 %v56
    %v86 = vunpack.c.l.b16 %v57
    %v87 = vpack.c.b16 %v76, %v75
    %v88 = vpack.c.b16 %v78, %v77
    %v89 = vpack.c.b16 %v80, %v79
    %v90 = vpack.c.b16 %v82, %v81
    %v91 = vpack.c.b16 %v84, %v83
    %v92 = vpack.c.b16 %v86, %v85
    %vm99 = vcmask 785408
    %v101 = vsel %vm99, %v45, 0
    %103 = vmatprep.subr.bf16.mxu0 0
    %104 = vmatpush1.bf16.msra.mxu0 %v87
    %105 = vmatprep.subr.bf16.mxu0 0
    %106 = vmatpush1.bf16.msra.mxu0 %v88
    %107 = vmatprep.subr.bf16.mxu0 0
    %108 = vmatpush1.bf16.msra.mxu0 %v89
    %109 = vmatprep.subr.bf16.mxu0 0
    %110 = vmatpush1.bf16.msra.mxu0 %v90
    %111 = vmatprep.subr.bf16.mxu0 0
    %112 = vmatpush1.bf16.msra.mxu0 %v91
    %113 = vmatprep.subr.bf16.mxu0 0
    %114 = vmatpush1.bf16.msra.mxu0 %v92
    %115 = vmatprep.subr.bf16.mxu0 0
    %116 = vmatpush1.bf16.msra.mxu0 0
    %117 = vmatprep.subr.bf16.mxu0 0
    %118 = vmatpush1.bf16.msra.mxu0 0
    %119 = vmatprep.subr.bf16.mxu0 0
    %120 = vmatpush1.bf16.msra.mxu0 0
    %121 = vmatprep.subr.bf16.mxu0 0
    %122 = vmatpush1.bf16.msra.mxu0 0
    %123 = vmatprep.subr.bf16.mxu0 0
    %124 = vmatpush1.bf16.msra.mxu0 0
    %125 = vmatprep.subr.bf16.mxu0 0
    %126 = vmatpush1.bf16.msra.mxu0 0
    %127 = vmatprep.subr.bf16.mxu0 0
    %128 = vmatpush1.bf16.msra.mxu0 0
    %129 = vmatprep.subr.bf16.mxu0 0
    %130 = vmatpush1.bf16.msra.mxu0 0
    %131 = vmatprep.subr.bf16.mxu0 0
    %132 = vmatpush1.bf16.msra.mxu0 0
    %133 = vmatprep.subr.bf16.mxu0 0
    %134 = vmatpush1.bf16.msra.mxu0 0
    %135 = vmatprep.mubr.bf16.mxu0 0
    %136 = vmatmul.mubr.bf16.gmra.mrb[0].mxu0 %v101
    %v137 = vpop.f32.mrb[0].mxu0
    %v138 = vadd.f32 %v62, %v137
    %v139 = vpop.f32.mrb[0].mxu0
    %v140 = vpop.f32.mrb[0].mxu0
    %v141 = vpop.f32.mrb[0].mxu0
    %142 = vdwg.mxu0
    %v143 = vxor.u32 %v138, 2147483648
    %v144 = vmul.f32 %v143, 1.442695
    %v145 = vpow.pop %v144
    %v146 = vadd.f32 %v145, 1.0
    %v147 = vrcp.pop %v146
    %v148 = vmul.f32 1.0, %v147
    %150 = vrot.lane.b32.xlu0 %v138, 32
    %v151 = vpop.permute.xlu0 %150
    %v153 = vmul.f32 %v148, %v151
    %155 = vrot.lane.b32.xlu0 %v153, 64
    %v156 = vpop.permute.xlu0 %155
    %v158 = vadd.f32 %v138, %v156
    %v159 = vtanh.pop %v158
    %v160 = vsub.f32 1.0, %v148
    %162 = vrot.lane.b32.xlu0 %v159, 96
    %v163 = vpop.permute.xlu0 %162
    %v165 = vmul.f32 %v160, %v163
    %167 = vrot.lane.b32.xlu0 %v44, 96
    %v168 = vpop.permute.xlu0 %167
    %v170 = vmul.f32 %v148, %v168
    %v171 = vadd.f32 %v165, %v170
    %v172 = vpack.c.bf16 %v171, %v171
    %v173 = vld [vmem:[#allocation5 + $0x30] sm:$0xf]
    %v174 = vld [vmem:[#allocation5 + $0x34] sm:$0xf]
    %v175 = vld [vmem:[#allocation5 + $0x38] sm:$0xf]
    %v176 = vld [vmem:[#allocation5 + $0x3c] sm:$0xf]
    %v177 = vld [vmem:[%s2 + $0x1] sm:$0x1]
    %v178 = vlaneseq
    %v179 = vshrl.u32 %v178, 7
    %v180 = vsub.s32 0, %v179
    %v181 = vrot.slane %v177, %v180
    %183 = vrot.lane.b32.xlu0 %v172, 96
    %v184 = vpop.permute.xlu0 %183
    %v189 = vunpack.c.l.b16 %v173
    %v190 = vunpack.c.l.b16 %v174
    %v191 = vunpack.c.l.b16 %v175
    %v192 = vunpack.c.l.b16 %v176
    %v193 = vpack.c.b16 %v190, %v189
    %v194 = vpack.c.b16 %v192, %v191
    %vm197 = vcmask 261120
    %v199 = vsel %vm197, %v184, 0
    %201 = vmatprep.subr.bf16.mxu0 0
    %202 = vmatpush1.bf16.msra.mxu0 %v193
    %203 = vmatprep.subr.bf16.mxu0 0
    %204 = vmatpush1.bf16.msra.mxu0 %v194
    %205 = vmatprep.subr.bf16.mxu0 0
    %206 = vmatpush1.bf16.msra.mxu0 0
    %207 = vmatprep.subr.bf16.mxu0 0
    %208 = vmatpush1.bf16.msra.mxu0 0
    %209 = vmatprep.subr.bf16.mxu0 0
    %210 = vmatpush1.bf16.msra.mxu0 0
    %211 = vmatprep.subr.bf16.mxu0 0
    %212 = vmatpush1.bf16.msra.mxu0 0
    %213 = vmatprep.subr.bf16.mxu0 0
    %214 = vmatpush1.bf16.msra.mxu0 0
    %215 = vmatprep.subr.bf16.mxu0 0
    %216 = vmatpush1.bf16.msra.mxu0 0
    %217 = vmatprep.subr.bf16.mxu0 0
    %218 = vmatpush1.bf16.msra.mxu0 0
    %219 = vmatprep.subr.bf16.mxu0 0
    %220 = vmatpush1.bf16.msra.mxu0 0
    %221 = vmatprep.subr.bf16.mxu0 0
    %222 = vmatpush1.bf16.msra.mxu0 0
    %223 = vmatprep.subr.bf16.mxu0 0
    %224 = vmatpush1.bf16.msra.mxu0 0
    %225 = vmatprep.subr.bf16.mxu0 0
    %226 = vmatpush1.bf16.msra.mxu0 0
    %227 = vmatprep.subr.bf16.mxu0 0
    %228 = vmatpush1.bf16.msra.mxu0 0
    %229 = vmatprep.subr.bf16.mxu0 0
    %230 = vmatpush1.bf16.msra.mxu0 0
    %231 = vmatprep.subr.bf16.mxu0 0
    %232 = vmatpush1.bf16.msra.mxu0 0
    %233 = vmatprep.mubr.bf16.mxu0 0
    %234 = vmatmul.mubr.bf16.gmra.mrb[0].mxu0 %v199
    %v235 = vpop.f32.mrb[0].mxu0
    %v236 = vadd.f32 %v181, %v235
    %v237 = vpop.f32.mrb[0].mxu0
    %v238 = vpop.f32.mrb[0].mxu0
    %v239 = vpop.f32.mrb[0].mxu0
    %240 = vdwg.mxu0
    %v241 = vmax.f32 %v236, 0.0
    %v242 = vpack.c.bf16 %v241, %v241
    %v243 = vld [vmem:[#allocation5 + $0x40] sm:$0xf]
    %v244 = vld [vmem:[#allocation5 + $0x44] sm:$0xf]
    %v245 = vld [vmem:[#allocation5 + $0x48] sm:$0xf]
    %v246 = vld [vmem:[#allocation5 + $0x4c] sm:$0xf]
    %v247 = vld [vmem:[%s2 + $0x2] sm:$0x1]
    %v248 = vlaneseq
    %v249 = vshrl.u32 %v248, 7
    %v250 = vsub.s32 0, %v249
    %v251 = vrot.slane %v247, %v250
    %v256 = vunpack.c.l.b16 %v243
    %v257 = vunpack.c.l.b16 %v244
    %v258 = vunpack.c.l.b16 %v245
    %v259 = vunpack.c.l.b16 %v246
    %v260 = vpack.c.b16 %v257, %v256
    %v261 = vpack.c.b16 %v259, %v258
    %v265 = vsel %vm197, %v242, 0
    %267 = vmatprep.subr.bf16.mxu0 0
    %268 = vmatpush1.bf16.msra.mxu0 %v260
    %269 = vmatprep.subr.bf16.mxu0 0
    %270 = vmatpush1.bf16.msra.mxu0 %v261
    %271 = vmatprep.subr.bf16.mxu0 0
    %272 = vmatpush1.bf16.msra.mxu0 0
    %273 = vmatprep.subr.bf16.mxu0 0
    %274 = vmatpush1.bf16.msra.mxu0 0
    %275 = vmatprep.subr.bf16.mxu0 0
    %276 = vmatpush1.bf16.msra.mxu0 0
    %277 = vmatprep.subr.bf16.mxu0 0
    %278 = vmatpush1.bf16.msra.mxu0 0
    %279 = vmatprep.subr.bf16.mxu0 0
    %280 = vmatpush1.bf16.msra.mxu0 0
    %281 = vmatprep.subr.bf16.mxu0 0
    %282 = vmatpush1.bf16.msra.mxu0 0
    %283 = vmatprep.subr.bf16.mxu0 0
    %284 = vmatpush1.bf16.msra.mxu0 0
    %285 = vmatprep.subr.bf16.mxu0 0
    %286 = vmatpush1.bf16.msra.mxu0 0
    %287 = vmatprep.subr.bf16.mxu0 0
    %288 = vmatpush1.bf16.msra.mxu0 0
    %289 = vmatprep.subr.bf16.mxu0 0
    %290 = vmatpush1.bf16.msra.mxu0 0
    %291 = vmatprep.subr.bf16.mxu0 0
    %292 = vmatpush1.bf16.msra.mxu0 0
    %293 = vmatprep.subr.bf16.mxu0 0
    %294 = vmatpush1.bf16.msra.mxu0 0
    %295 = vmatprep.subr.bf16.mxu0 0
    %296 = vmatpush1.bf16.msra.mxu0 0
    %297 = vmatprep.subr.bf16.mxu0 0
    %298 = vmatpush1.bf16.msra.mxu0 0
    %299 = vmatprep.mubr.bf16.mxu0 0
    %300 = vmatmul.mubr.bf16.gmra.mrb[0].mxu0 %v265
    %v301 = vpop.f32.mrb[0].mxu0
    %v302 = vadd.f32 %v251, %v301
    %v303 = vpop.f32.mrb[0].mxu0
    %v304 = vpop.f32.mrb[0].mxu0
    %v305 = vpop.f32.mrb[0].mxu0
    %306 = vdwg.mxu0
    %vm307 = vcmask 64512
    %v308 = vsel %vm307, %v302, -inf
    %309 = vmax.xlane.f32.xlu0 %v308
    %v310 = vpop.xlane.xlu0 %309
    %v311 = vsub.f32 %v302, %v310
    %v312 = vmul.f32 %v311, 1.442695
    %v313 = vpow.pop %v312
    %v314 = vsel %vm307, %v313, 0.0
    %315 = vadd.xlane.f32.xlu0 %v314
    %v316 = vpop.xlane.xlu0 %315
    %v317 = vrcp.pop %v316
    %v318 = vmul.f32 %v313, %v317
    %320 = vrot.lane.b32.xlu0 %v171, 104
    %v321 = vpop.permute.xlu0 %320
    %v323 = vsel %vm307, %v318, %v321
    %vm324 = vcmask 326656
    %v325 = vsel %vm324, %v323, 0.0
    %326 = vst [vmem:[#allocation7] sm:$0xff] %v325
    %s327 = scalar_lea.vmem [#allocation2], 8
    %v328 = vld [vmem:[%s327] sm:$0xff]
    %v329 = vpack.c.bf16 %v328, %v328
    %s330 = scalar_lea.vmem [#allocation5], 80
    %v331 = vld [vmem:[%s330] sm:$0xf]
    %v332 = vld [vmem:[%s330 + $0x4] sm:$0xf]
    %v333 = vld [vmem:[%s330 + $0x8] sm:$0xf]
    %v334 = vld [vmem:[%s330 + $0xc] sm:$0xf]
    %v335 = vld [vmem:[%s330 + $0x10] sm:$0xf]
    %v336 = vld [vmem:[%s330 + $0x14] sm:$0xf]
    %v337 = vld [vmem:[%s330 + $0x18] sm:$0xf]
    %v338 = vld [vmem:[%s330 + $0x1c] sm:$0xf]
    %v339 = vld [vmem:[%s330 + $0x20] sm:$0xf]
    %v340 = vld [vmem:[%s330 + $0x24] sm:$0xf]
    %v341 = vld [vmem:[%s330 + $0x28] sm:$0xf]
    %v342 = vld [vmem:[%s330 + $0x2c] sm:$0xf]
    %s343 = scalar_lea.vmem %s2, 4
    %v344 = vld [vmem:[%s343] sm:$0x1]
    %v345 = vlaneseq
    %v346 = vshrl.u32 %v345, 7
    %v347 = vsub.s32 0, %v346
    %v348 = vrot.slane %v344, %v347
    %v361 = vunpack.c.l.b16 %v331
    %v362 = vunpack.c.l.b16 %v332
    %v363 = vunpack.c.l.b16 %v333
    %v364 = vunpack.c.l.b16 %v334
    %v365 = vunpack.c.l.b16 %v335
    %v366 = vunpack.c.l.b16 %v336
    %v367 = vunpack.c.l.b16 %v337
    %v368 = vunpack.c.l.b16 %v338
    %v369 = vunpack.c.l.b16 %v339
    %v370 = vunpack.c.l.b16 %v340
    %v371 = vunpack.c.l.b16 %v341
    %v372 = vunpack.c.l.b16 %v342
    %v373 = vpack.c.b16 %v362, %v361
    %v374 = vpack.c.b16 %v364, %v363
    %v375 = vpack.c.b16 %v366, %v365
    %v376 = vpack.c.b16 %v368, %v367
    %v377 = vpack.c.b16 %v370, %v369
    %v378 = vpack.c.b16 %v372, %v371
    %v386 = vsel %vm99, %v329, 0
    %388 = vmatprep.subr.bf16.mxu0 0
    %389 = vmatpush1.bf16.msra.mxu0 %v373
    %390 = vmatprep.subr.bf16.mxu0 0
    %391 = vmatpush1.bf16.msra.mxu0 %v374
    %392 = vmatprep.subr.bf16.mxu0 0
    %393 = vmatpush1.bf16.msra.mxu0 %v375
    %394 = vmatprep.subr.bf16.mxu0 0
    %395 = vmatpush1.bf16.msra.mxu0 %v376
    %396 = vmatprep.subr.bf16.mxu0 0
    %397 = vmatpush1.bf16.msra.mxu0 %v377
    %398 = vmatprep.subr.bf16.mxu0 0
    %399 = vmatpush1.bf16.msra.mxu0 %v378
    %400 = vmatprep.subr.bf16.mxu0 0
    %401 = vmatpush1.bf16.msra.mxu0 0
    %402 = vmatprep.subr.bf16.mxu0 0
    %403 = vmatpush1.bf16.msra.mxu0 0
    %404 = vmatprep.subr.bf16.mxu0 0
    %405 = vmatpush1.bf16.msra.mxu0 0
    %406 = vmatprep.subr.bf16.mxu0 0
    %407 = vmatpush1.bf16.msra.mxu0 0
    %408 = vmatprep.subr.bf16.mxu0 0
    %409 = vmatpush1.bf16.msra.mxu0 0
    %410 = vmatprep.subr.bf16.mxu0 0
    %411 = vmatpush1.bf16.msra.mxu0 0
    %412 = vmatprep.subr.bf16.mxu0 0
    %413 = vmatpush1.bf16.msra.mxu0 0
    %414 = vmatprep.subr.bf16.mxu0 0
    %415 = vmatpush1.bf16.msra.mxu0 0
    %416 = vmatprep.subr.bf16.mxu0 0
    %417 = vmatpush1.bf16.msra.mxu0 0
    %418 = vmatprep.subr.bf16.mxu0 0
    %419 = vmatpush1.bf16.msra.mxu0 0
    %420 = vmatprep.mubr.bf16.mxu0 0
    %421 = vmatmul.mubr.bf16.gmra.mrb[0].mxu0 %v386
    %v422 = vpop.f32.mrb[0].mxu0
    %v423 = vadd.f32 %v348, %v422
    %v424 = vpop.f32.mrb[0].mxu0
    %v425 = vpop.f32.mrb[0].mxu0
    %v426 = vpop.f32.mrb[0].mxu0
    %427 = vdwg.mxu0
    %v428 = vxor.u32 %v423, 2147483648
    %v429 = vmul.f32 %v428, 1.442695
    %v430 = vpow.pop %v429
    %v431 = vadd.f32 %v430, 1.0
    %v432 = vrcp.pop %v431
    %v433 = vmul.f32 1.0, %v432
    %435 = vrot.lane.b32.xlu0 %v423, 32
    %v436 = vpop.permute.xlu0 %435
    %v438 = vmul.f32 %v433, %v436
    %440 = vrot.lane.b32.xlu0 %v438, 64
    %v441 = vpop.permute.xlu0 %440
    %v443 = vadd.f32 %v423, %v441
    %v444 = vtanh.pop %v443
    %v445 = vsub.f32 1.0, %v433
    %447 = vrot.lane.b32.xlu0 %v444, 96
    %v448 = vpop.permute.xlu0 %447
    %v450 = vmul.f32 %v445, %v448
    %452 = vrot.lane.b32.xlu0 %v328, 96
    %v453 = vpop.permute.xlu0 %452
    %v455 = vmul.f32 %v433, %v453
    %v456 = vadd.f32 %v450, %v455
    %v457 = vpack.c.bf16 %v456, %v456
    %v458 = vld [vmem:[%s330 + $0x30] sm:$0xf]
    %v459 = vld [vmem:[%s330 + $0x34] sm:$0xf]
    %v460 = vld [vmem:[%s330 + $0x38] sm:$0xf]
    %v461 = vld [vmem:[%s330 + $0x3c] sm:$0xf]
    %v462 = vld [vmem:[%s343 + $0x1] sm:$0x1]
    %v463 = vlaneseq
    %v464 = vshrl.u32 %v463, 7
    %v465 = vsub.s32 0, %v464
    %v466 = vrot.slane %v462, %v465
    %468 = vrot.lane.b32.xlu0 %v457, 96
    %v469 = vpop.permute.xlu0 %468
    %v474 = vunpack.c.l.b16 %v458
    %v475 = vunpack.c.l.b16 %v459
    %v476 = vunpack.c.l.b16 %v460
    %v477 = vunpack.c.l.b16 %v461
    %v478 = vpack.c.b16 %v475, %v474
    %v479 = vpack.c.b16 %v477, %v476
    %v483 = vsel %vm197, %v469, 0
    %485 = vmatprep.subr.bf16.mxu0 0
    %486 = vmatpush1.bf16.msra.mxu0 %v478
    %487 = vmatprep.subr.bf16.mxu0 0
    %488 = vmatpush1.bf16.msra.mxu0 %v479
    %489 = vmatprep.subr.bf16.mxu0 0
    %490 = vmatpush1.bf16.msra.mxu0 0
    %491 = vmatprep.subr.bf16.mxu0 0
    %492 = vmatpush1.bf16.msra.mxu0 0
    %493 = vmatprep.subr.bf16.mxu0 0
    %494 = vmatpush1.bf16.msra.mxu0 0
    %495 = vmatprep.subr.bf16.mxu0 0
    %496 = vmatpush1.bf16.msra.mxu0 0
    %497 = vmatprep.subr.bf16.mxu0 0
    %498 = vmatpush1.bf16.msra.mxu0 0
    %499 = vmatprep.subr.bf16.mxu0 0
    %500 = vmatpush1.bf16.msra.mxu0 0
    %501 = vmatprep.subr.bf16.mxu0 0
    %502 = vmatpush1.bf16.msra.mxu0 0
    %503 = vmatprep.subr.bf16.mxu0 0
    %504 = vmatpush1.bf16.msra.mxu0 0
    %505 = vmatprep.subr.bf16.mxu0 0
    %506 = vmatpush1.bf16.msra.mxu0 0
    %507 = vmatprep.subr.bf16.mxu0 0
    %508 = vmatpush1.bf16.msra.mxu0 0
    %509 = vmatprep.subr.bf16.mxu0 0
    %510 = vmatpush1.bf16.msra.mxu0 0
    %511 = vmatprep.subr.bf16.mxu0 0
    %512 = vmatpush1.bf16.msra.mxu0 0
    %513 = vmatprep.subr.bf16.mxu0 0
    %514 = vmatpush1.bf16.msra.mxu0 0
    %515 = vmatprep.subr.bf16.mxu0 0
    %516 = vmatpush1.bf16.msra.mxu0 0
    %517 = vmatprep.mubr.bf16.mxu0 0
    %518 = vmatmul.mubr.bf16.gmra.mrb[0].mxu0 %v483
    %v519 = vpop.f32.mrb[0].mxu0
    %v520 = vadd.f32 %v466, %v519
    %v521 = vpop.f32.mrb[0].mxu0
    %v522 = vpop.f32.mrb[0].mxu0
    %v523 = vpop.f32.mrb[0].mxu0
    %524 = vdwg.mxu0
    %v525 = vmax.f32 %v520, 0.0
    %v526 = vpack.c.bf16 %v525, %v525
    %v527 = vld [vmem:[%s330 + $0x40] sm:$0xf]
    %v528 = vld [vmem:[%s330 + $0x44] sm:$0xf]
    %v529 = vld [vmem:[%s330 + $0x48] sm:$0xf]
    %v530 = vld [vmem:[%s330 + $0x4c] sm:$0xf]
    %v531 = vld [vmem:[%s343 + $0x2] sm:$0x1]
    %v532 = vlaneseq
    %v533 = vshrl.u32 %v532, 7
    %v534 = vsub.s32 0, %v533
    %v535 = vrot.slane %v531, %v534
    %v540 = vunpack.c.l.b16 %v527
    %v541 = vunpack.c.l.b16 %v528
    %v542 = vunpack.c.l.b16 %v529
    %v543 = vunpack.c.l.b16 %v530
    %v544 = vpack.c.b16 %v541, %v540
    %v545 = vpack.c.b16 %v543, %v542
    %v549 = vsel %vm197, %v526, 0
    %551 = vmatprep.subr.bf16.mxu0 0
    %552 = vmatpush1.bf16.msra.mxu0 %v544
    %553 = vmatprep.subr.bf16.mxu0 0
    %554 = vmatpush1.bf16.msra.mxu0 %v545
    %555 = vmatprep.subr.bf16.mxu0 0
    %556 = vmatpush1.bf16.msra.mxu0 0
    %557 = vmatprep.subr.bf16.mxu0 0
    %558 = vmatpush1.bf16.msra.mxu0 0
    %559 = vmatprep.subr.bf16.mxu0 0
    %560 = vmatpush1.bf16.msra.mxu0 0
    %561 = vmatprep.subr.bf16.mxu0 0
    %562 = vmatpush1.bf16.msra.mxu0 0
    %563 = vmatprep.subr.bf16.mxu0 0
    %564 = vmatpush1.bf16.msra.mxu0 0
    %565 = vmatprep.subr.bf16.mxu0 0
    %566 = vmatpush1.bf16.msra.mxu0 0
    %567 = vmatprep.subr.bf16.mxu0 0
    %568 = vmatpush1.bf16.msra.mxu0 0
    %569 = vmatprep.subr.bf16.mxu0 0
    %570 = vmatpush1.bf16.msra.mxu0 0
    %571 = vmatprep.subr.bf16.mxu0 0
    %572 = vmatpush1.bf16.msra.mxu0 0
    %573 = vmatprep.subr.bf16.mxu0 0
    %574 = vmatpush1.bf16.msra.mxu0 0
    %575 = vmatprep.subr.bf16.mxu0 0
    %576 = vmatpush1.bf16.msra.mxu0 0
    %577 = vmatprep.subr.bf16.mxu0 0
    %578 = vmatpush1.bf16.msra.mxu0 0
    %579 = vmatprep.subr.bf16.mxu0 0
    %580 = vmatpush1.bf16.msra.mxu0 0
    %581 = vmatprep.subr.bf16.mxu0 0
    %582 = vmatpush1.bf16.msra.mxu0 0
    %583 = vmatprep.mubr.bf16.mxu0 0
    %584 = vmatmul.mubr.bf16.gmra.mrb[0].mxu0 %v549
    %v585 = vpop.f32.mrb[0].mxu0
    %v586 = vadd.f32 %v535, %v585
    %v587 = vpop.f32.mrb[0].mxu0
    %v588 = vpop.f32.mrb[0].mxu0
    %v589 = vpop.f32.mrb[0].mxu0
    %590 = vdwg.mxu0
    %v591 = vsel %vm307, %v586, -inf
    %592 = vmax.xlane.f32.xlu0 %v591
    %v593 = vpop.xlane.xlu0 %592
    %v594 = vsub.f32 %v586, %v593
    %v595 = vmul.f32 %v594, 1.442695
    %v596 = vpow.pop %v595
    %v597 = vsel %vm307, %v596, 0.0
    %598 = vadd.xlane.f32.xlu0 %v597
    %v599 = vpop.xlane.xlu0 %598
    %v600 = vrcp.pop %v599
    %v601 = vmul.f32 %v596, %v600
    %603 = vrot.lane.b32.xlu0 %v456, 104
    %v604 = vpop.permute.xlu0 %603
    %v606 = vsel %vm307, %v601, %v604
    %v607 = vsel %vm324, %v606, 0.0
    %s608 = scalar_lea.vmem [#allocation7], 8
    %609 = vst [vmem:[%s608] sm:$0xff] %v607
    %s610 = scalar_lea.vmem [#allocation2], 16
    %v611 = vld [vmem:[%s610] sm:$0xff]
    %v612 = vpack.c.bf16 %v611, %v611
    %s613 = scalar_lea.vmem [#allocation5], 160
    %v614 = vld [vmem:[%s613] sm:$0xf]
    %v615 = vld [vmem:[%s613 + $0x4] sm:$0xf]
    %v616 = vld [vmem:[%s613 + $0x8] sm:$0xf]
    %v617 = vld [vmem:[%s613 + $0xc] sm:$0xf]
    %v618 = vld [vmem:[%s613 + $0x10] sm:$0xf]
    %v619 = vld [vmem:[%s613 + $0x14] sm:$0xf]
    %v620 = vld [vmem:[%s613 + $0x18] sm:$0xf]
    %v621 = vld [vmem:[%s613 + $0x1c] sm:$0xf]
    %v622 = vld [vmem:[%s613 + $0x20] sm:$0xf]
    %v623 = vld [vmem:[%s613 + $0x24] sm:$0xf]
    %v624 = vld [vmem:[%s613 + $0x28] sm:$0xf]
    %v625 = vld [vmem:[%s613 + $0x2c] sm:$0xf]
    %s626 = scalar_lea.vmem %s2, 8
    %v627 = vld [vmem:[%s626] sm:$0x1]
    %v628 = vlaneseq
    %v629 = vshrl.u32 %v628, 7
    %v630 = vsub.s32 0, %v629
    %v631 = vrot.slane %v627, %v630
    %v644 = vunpack.c.l.b16 %v614
    %v645 = vunpack.c.l.b16 %v615
    %v646 = vunpack.c.l.b16 %v616
    %v647 = vunpack.c.l.b16 %v617
    %v648 = vunpack.c.l.b16 %v618
    %v649 = vunpack.c.l.b16 %v619
    %v650 = vunpack.c.l.b16 %v620
    %v651 = vunpack.c.l.b16 %v621
    %v652 = vunpack.c.l.b16 %v622
    %v653 = vunpack.c.l.b16 %v623
    %v654 = vunpack.c.l.b16 %v624
    %v655 = vunpack.c.l.b16 %v625
    %v656 = vpack.c.b16 %v645, %v644
    %v657 = vpack.c.b16 %v647, %v646
    %v658 = vpack.c.b16 %v649, %v648
    %v659 = vpack.c.b16 %v651, %v650
    %v660 = vpack.c.b16 %v653, %v652
    %v661 = vpack.c.b16 %v655, %v654
    %v669 = vsel %vm99, %v612, 0
    %671 = vmatprep.subr.bf16.mxu0 0
    %672 = vmatpush1.bf16.msra.mxu0 %v656
    %673 = vmatprep.subr.bf16.mxu0 0
    %674 = vmatpush1.bf16.msra.mxu0 %v657
    %675 = vmatprep.subr.bf16.mxu0 0
    %676 = vmatpush1.bf16.msra.mxu0 %v658
    %677 = vmatprep.subr.bf16.mxu0 0
    %678 = vmatpush1.bf16.msra.mxu0 %v659
    %679 = vmatprep.subr.bf16.mxu0 0
    %680 = vmatpush1.bf16.msra.mxu0 %v660
    %681 = vmatprep.subr.bf16.mxu0 0
    %682 = vmatpush1.bf16.msra.mxu0 %v661
    %683 = vmatprep.subr.bf16.mxu0 0
    %684 = vmatpush1.bf16.msra.mxu0 0
    %685 = vmatprep.subr.bf16.mxu0 0
    %686 = vmatpush1.bf16.msra.mxu0 0
    %687 = vmatprep.subr.bf16.mxu0 0
    %688 = vmatpush1.bf16.msra.mxu0 0
    %689 = vmatprep.subr.bf16.mxu0 0
    %690 = vmatpush1.bf16.msra.mxu0 0
    %691 = vmatprep.subr.bf16.mxu0 0
    %692 = vmatpush1.bf16.msra.mxu0 0
    %693 = vmatprep.subr.bf16.mxu0 0
    %694 = vmatpush1.bf16.msra.mxu0 0
    %695 = vmatprep.subr.bf16.mxu0 0
    %696 = vmatpush1.bf16.msra.mxu0 0
    %697 = vmatprep.subr.bf16.mxu0 0
    %698 = vmatpush1.bf16.msra.mxu0 0
    %699 = vmatprep.subr.bf16.mxu0 0
    %700 = vmatpush1.bf16.msra.mxu0 0
    %701 = vmatprep.subr.bf16.mxu0 0
    %702 = vmatpush1.bf16.msra.mxu0 0
    %703 = vmatprep.mubr.bf16.mxu0 0
    %704 = vmatmul.mubr.bf16.gmra.mrb[0].mxu0 %v669
    %v705 = vpop.f32.mrb[0].mxu0
    %v706 = vadd.f32 %v631, %v705
    %v707 = vpop.f32.mrb[0].mxu0
    %v708 = vpop.f32.mrb[0].mxu0
    %v709 = vpop.f32.mrb[0].mxu0
    %710 = vdwg.mxu0
    %v711 = vxor.u32 %v706, 2147483648
    %v712 = vmul.f32 %v711, 1.442695
    %v713 = vpow.pop %v712
    %v714 = vadd.f32 %v713, 1.0
    %v715 = vrcp.pop %v714
    %v716 = vmul.f32 1.0, %v715
    %718 = vrot.lane.b32.xlu0 %v706, 32
    %v719 = vpop.permute.xlu0 %718
    %v721 = vmul.f32 %v716, %v719
    %723 = vrot.lane.b32.xlu0 %v721, 64
    %v724 = vpop.permute.xlu0 %723
    %v726 = vadd.f32 %v706, %v724
    %v727 = vtanh.pop %v726
    %v728 = vsub.f32 1.0, %v716
    %730 = vrot.lane.b32.xlu0 %v727, 96
    %v731 = vpop.permute.xlu0 %730
    %v733 = vmul.f32 %v728, %v731
    %735 = vrot.lane.b32.xlu0 %v611, 96
    %v736 = vpop.permute.xlu0 %735
    %v738 = vmul.f32 %v716, %v736
    %v739 = vadd.f32 %v733, %v738
    %v740 = vpack.c.bf16 %v739, %v739
    %v741 = vld [vmem:[%s613 + $0x30] sm:$0xf]
    %v742 = vld [vmem:[%s613 + $0x34] sm:$0xf]
    %v743 = vld [vmem:[%s613 + $0x38] sm:$0xf]
    %v744 = vld [vmem:[%s613 + $0x3c] sm:$0xf]
    %v745 = vld [vmem:[%s626 + $0x1] sm:$0x1]
    %v746 = vlaneseq
    %v747 = vshrl.u32 %v746, 7
    %v748 = vsub.s32 0, %v747
    %v749 = vrot.slane %v745, %v748
    %751 = vrot.lane.b32.xlu0 %v740, 96
    %v752 = vpop.permute.xlu0 %751
    %v757 = vunpack.c.l.b16 %v741
    %v758 = vunpack.c.l.b16 %v742
    %v759 = vunpack.c.l.b16 %v743
    %v760 = vunpack.c.l.b16 %v744
    %v761 = vpack.c.b16 %v758, %v757
    %v762 = vpack.c.b16 %v760, %v759
    %v766 = vsel %vm197, %v752, 0
    %768 = vmatprep.subr.bf16.mxu0 0
    %769 = vmatpush1.bf16.msra.mxu0 %v761
    %770 = vmatprep.subr.bf16.mxu0 0
    %771 = vmatpush1.bf16.msra.mxu0 %v762
    %772 = vmatprep.subr.bf16.mxu0 0
    %773 = vmatpush1.bf16.msra.mxu0 0
    %774 = vmatprep.subr.bf16.mxu0 0
    %775 = vmatpush1.bf16.msra.mxu0 0
    %776 = vmatprep.subr.bf16.mxu0 0
    %777 = vmatpush1.bf16.msra.mxu0 0
    %778 = vmatprep.subr.bf16.mxu0 0
    %779 = vmatpush1.bf16.msra.mxu0 0
    %780 = vmatprep.subr.bf16.mxu0 0
    %781 = vmatpush1.bf16.msra.mxu0 0
    %782 = vmatprep.subr.bf16.mxu0 0
    %783 = vmatpush1.bf16.msra.mxu0 0
    %784 = vmatprep.subr.bf16.mxu0 0
    %785 = vmatpush1.bf16.msra.mxu0 0
    %786 = vmatprep.subr.bf16.mxu0 0
    %787 = vmatpush1.bf16.msra.mxu0 0
    %788 = vmatprep.subr.bf16.mxu0 0
    %789 = vmatpush1.bf16.msra.mxu0 0
    %790 = vmatprep.subr.bf16.mxu0 0
    %791 = vmatpush1.bf16.msra.mxu0 0
    %792 = vmatprep.subr.bf16.mxu0 0
    %793 = vmatpush1.bf16.msra.mxu0 0
    %794 = vmatprep.subr.bf16.mxu0 0
    %795 = vmatpush1.bf16.msra.mxu0 0
    %796 = vmatprep.subr.bf16.mxu0 0
    %797 = vmatpush1.bf16.msra.mxu0 0
    %798 = vmatprep.subr.bf16.mxu0 0
    %799 = vmatpush1.bf16.msra.mxu0 0
    %800 = vmatprep.mubr.bf16.mxu0 0
    %801 = vmatmul.mubr.bf16.gmra.mrb[0].mxu0 %v766
    %v802 = vpop.f32.mrb[0].mxu0
    %v803 = vadd.f32 %v749, %v802
    %v804 = vpop.f32.mrb[0].mxu0
    %v805 = vpop.f32.mrb[0].mxu0
    %v806 = vpop.f32.mrb[0].mxu0
    %807 = vdwg.mxu0
    %v808 = vmax.f32 %v803, 0.0
    %v809 = vpack.c.bf16 %v808, %v808
    %v810 = vld [vmem:[%s613 + $0x40] sm:$0xf]
    %v811 = vld [vmem:[%s613 + $0x44] sm:$0xf]
    %v812 = vld [vmem:[%s613 + $0x48] sm:$0xf]
    %v813 = vld [vmem:[%s613 + $0x4c] sm:$0xf]
    %v814 = vld [vmem:[%s626 + $0x2] sm:$0x1]
    %v815 = vlaneseq
    %v816 = vshrl.u32 %v815, 7
    %v817 = vsub.s32 0, %v816
    %v818 = vrot.slane %v814, %v817
    %v823 = vunpack.c.l.b16 %v810
    %v824 = vunpack.c.l.b16 %v811
    %v825 = vunpack.c.l.b16 %v812
    %v826 = vunpack.c.l.b16 %v813
    %v827 = vpack.c.b16 %v824, %v823
    %v828 = vpack.c.b16 %v826, %v825
    %v832 = vsel %vm197, %v809, 0
    %834 = vmatprep.subr.bf16.mxu0 0
    %835 = vmatpush1.bf16.msra.mxu0 %v827
    %836 = vmatprep.subr.bf16.mxu0 0
    %837 = vmatpush1.bf16.msra.mxu0 %v828
    %838 = vmatprep.subr.bf16.mxu0 0
    %839 = vmatpush1.bf16.msra.mxu0 0
    %840 = vmatprep.subr.bf16.mxu0 0
    %841 = vmatpush1.bf16.msra.mxu0 0
    %842 = vmatprep.subr.bf16.mxu0 0
    %843 = vmatpush1.bf16.msra.mxu0 0
    %844 = vmatprep.subr.bf16.mxu0 0
    %845 = vmatpush1.bf16.msra.mxu0 0
    %846 = vmatprep.subr.bf16.mxu0 0
    %847 = vmatpush1.bf16.msra.mxu0 0
    %848 = vmatprep.subr.bf16.mxu0 0
    %849 = vmatpush1.bf16.msra.mxu0 0
    %850 = vmatprep.subr.bf16.mxu0 0
    %851 = vmatpush1.bf16.msra.mxu0 0
    %852 = vmatprep.subr.bf16.mxu0 0
    %853 = vmatpush1.bf16.msra.mxu0 0
    %854 = vmatprep.subr.bf16.mxu0 0
    %855 = vmatpush1.bf16.msra.mxu0 0
    %856 = vmatprep.subr.bf16.mxu0 0
    %857 = vmatpush1.bf16.msra.mxu0 0
    %858 = vmatprep.subr.bf16.mxu0 0
    %859 = vmatpush1.bf16.msra.mxu0 0
    %860 = vmatprep.subr.bf16.mxu0 0
    %861 = vmatpush1.bf16.msra.mxu0 0
    %862 = vmatprep.subr.bf16.mxu0 0
    %863 = vmatpush1.bf16.msra.mxu0 0
    %864 = vmatprep.subr.bf16.mxu0 0
    %865 = vmatpush1.bf16.msra.mxu0 0
    %866 = vmatprep.mubr.bf16.mxu0 0
    %867 = vmatmul.mubr.bf16.gmra.mrb[0].mxu0 %v832
    %v868 = vpop.f32.mrb[0].mxu0
    %v869 = vadd.f32 %v818, %v868
    %v870 = vpop.f32.mrb[0].mxu0
    %v871 = vpop.f32.mrb[0].mxu0
    %v872 = vpop.f32.mrb[0].mxu0
    %873 = vdwg.mxu0
    %v874 = vsel %vm307, %v869, -inf
    %875 = vmax.xlane.f32.xlu0 %v874
    %v876 = vpop.xlane.xlu0 %875
    %v877 = vsub.f32 %v869, %v876
    %v878 = vmul.f32 %v877, 1.442695
    %v879 = vpow.pop %v878
    %v880 = vsel %vm307, %v879, 0.0
    %881 = vadd.xlane.f32.xlu0 %v880
    %v882 = vpop.xlane.xlu0 %881
    %v883 = vrcp.pop %v882
    %v884 = vmul.f32 %v879, %v883
    %886 = vrot.lane.b32.xlu0 %v739, 104
    %v887 = vpop.permute.xlu0 %886
    %v889 = vsel %vm307, %v884, %v887
    %v890 = vsel %vm324, %v889, 0.0
    %s891 = scalar_lea.vmem [#allocation7], 16
    %892 = vst [vmem:[%s891] sm:$0xff] %v890
    %s893 = scalar_lea.vmem [#allocation2], 24
    %v894 = vld [vmem:[%s893] sm:$0xff]
    %v895 = vpack.c.bf16 %v894, %v894
    %s896 = scalar_lea.vmem [#allocation5], 240
    %v897 = vld [vmem:[%s896] sm:$0xf]
    %v898 = vld [vmem:[%s896 + $0x4] sm:$0xf]
    %v899 = vld [vmem:[%s896 + $0x8] sm:$0xf]
    %v900 = vld [vmem:[%s896 + $0xc] sm:$0xf]
    %v901 = vld [vmem:[%s896 + $0x10] sm:$0xf]
    %v902 = vld [vmem:[%s896 + $0x14] sm:$0xf]
    %v903 = vld [vmem:[%s896 + $0x18] sm:$0xf]
    %v904 = vld [vmem:[%s896 + $0x1c] sm:$0xf]
    %v905 = vld [vmem:[%s896 + $0x20] sm:$0xf]
    %v906 = vld [vmem:[%s896 + $0x24] sm:$0xf]
    %v907 = vld [vmem:[%s896 + $0x28] sm:$0xf]
    %v908 = vld [vmem:[%s896 + $0x2c] sm:$0xf]
    %s909 = scalar_lea.vmem %s2, 12
    %v910 = vld [vmem:[%s909] sm:$0x1]
    %v911 = vlaneseq
    %v912 = vshrl.u32 %v911, 7
    %v913 = vsub.s32 0, %v912
    %v914 = vrot.slane %v910, %v913
    %v927 = vunpack.c.l.b16 %v897
    %v928 = vunpack.c.l.b16 %v898
    %v929 = vunpack.c.l.b16 %v899
    %v930 = vunpack.c.l.b16 %v900
    %v931 = vunpack.c.l.b16 %v901
    %v932 = vunpack.c.l.b16 %v902
    %v933 = vunpack.c.l.b16 %v903
    %v934 = vunpack.c.l.b16 %v904
    %v935 = vunpack.c.l.b16 %v905
    %v936 = vunpack.c.l.b16 %v906
    %v937 = vunpack.c.l.b16 %v907
    %v938 = vunpack.c.l.b16 %v908
    %v939 = vpack.c.b16 %v928, %v927
    %v940 = vpack.c.b16 %v930, %v929
    %v941 = vpack.c.b16 %v932, %v931
    %v942 = vpack.c.b16 %v934, %v933
    %v943 = vpack.c.b16 %v936, %v935
    %v944 = vpack.c.b16 %v938, %v937
    %v952 = vsel %vm99, %v895, 0
    %954 = vmatprep.subr.bf16.mxu0 0
    %955 = vmatpush1.bf16.msra.mxu0 %v939
    %956 = vmatprep.subr.bf16.mxu0 0
    %957 = vmatpush1.bf16.msra.mxu0 %v940
    %958 = vmatprep.subr.bf16.mxu0 0
    %959 = vmatpush1.bf16.msra.mxu0 %v941
    %960 = vmatprep.subr.bf16.mxu0 0
    %961 = vmatpush1.bf16.msra.mxu0 %v942
    %962 = vmatprep.subr.bf16.mxu0 0
    %963 = vmatpush1.bf16.msra.mxu0 %v943
    %964 = vmatprep.subr.bf16.mxu0 0
    %965 = vmatpush1.bf16.msra.mxu0 %v944
    %966 = vmatprep.subr.bf16.mxu0 0
    %967 = vmatpush1.bf16.msra.mxu0 0
    %968 = vmatprep.subr.bf16.mxu0 0
    %969 = vmatpush1.bf16.msra.mxu0 0
    %970 = vmatprep.subr.bf16.mxu0 0
    %971 = vmatpush1.bf16.msra.mxu0 0
    %972 = vmatprep.subr.bf16.mxu0 0
    %973 = vmatpush1.bf16.msra.mxu0 0
    %974 = vmatprep.subr.bf16.mxu0 0
    %975 = vmatpush1.bf16.msra.mxu0 0
    %976 = vmatprep.subr.bf16.mxu0 0
    %977 = vmatpush1.bf16.msra.mxu0 0
    %978 = vmatprep.subr.bf16.mxu0 0
    %979 = vmatpush1.bf16.msra.mxu0 0
    %980 = vmatprep.subr.bf16.mxu0 0
    %981 = vmatpush1.bf16.msra.mxu0 0
    %982 = vmatprep.subr.bf16.mxu0 0
    %983 = vmatpush1.bf16.msra.mxu0 0
    %984 = vmatprep.subr.bf16.mxu0 0
    %985 = vmatpush1.bf16.msra.mxu0 0
    %986 = vmatprep.mubr.bf16.mxu0 0
    %987 = vmatmul.mubr.bf16.gmra.mrb[0].mxu0 %v952
    %v988 = vpop.f32.mrb[0].mxu0
    %v989 = vadd.f32 %v914, %v988
    %v990 = vpop.f32.mrb[0].mxu0
    %v991 = vpop.f32.mrb[0].mxu0
    %v992 = vpop.f32.mrb[0].mxu0
    %993 = vdwg.mxu0
    %v994 = vxor.u32 %v989, 2147483648
    %v995 = vmul.f32 %v994, 1.442695
    %v996 = vpow.pop %v995
    %v997 = vadd.f32 %v996, 1.0
    %v998 = vrcp.pop %v997
    %v999 = vmul.f32 1.0, %v998
    %1001 = vrot.lane.b32.xlu0 %v989, 32
    %v1002 = vpop.permute.xlu0 %1001
    %v1004 = vmul.f32 %v999, %v1002
    %1006 = vrot.lane.b32.xlu0 %v1004, 64
    %v1007 = vpop.permute.xlu0 %1006
    %v1009 = vadd.f32 %v989, %v1007
    %v1010 = vtanh.pop %v1009
    %v1011 = vsub.f32 1.0, %v999
    %1013 = vrot.lane.b32.xlu0 %v1010, 96
    %v1014 = vpop.permute.xlu0 %1013
    %v1016 = vmul.f32 %v1011, %v1014
    %1018 = vrot.lane.b32.xlu0 %v894, 96
    %v1019 = vpop.permute.xlu0 %1018
    %v1021 = vmul.f32 %v999, %v1019
    %v1022 = vadd.f32 %v1016, %v1021
    %v1023 = vpack.c.bf16 %v1022, %v1022
    %v1024 = vld [vmem:[%s896 + $0x30] sm:$0xf]
    %v1025 = vld [vmem:[%s896 + $0x34] sm:$0xf]
    %v1026 = vld [vmem:[%s896 + $0x38] sm:$0xf]
    %v1027 = vld [vmem:[%s896 + $0x3c] sm:$0xf]
    %v1028 = vld [vmem:[%s909 + $0x1] sm:$0x1]
    %v1029 = vlaneseq
    %v1030 = vshrl.u32 %v1029, 7
    %v1031 = vsub.s32 0, %v1030
    %v1032 = vrot.slane %v1028, %v1031
    %1034 = vrot.lane.b32.xlu0 %v1023, 96
    %v1035 = vpop.permute.xlu0 %1034
    %v1040 = vunpack.c.l.b16 %v1024
    %v1041 = vunpack.c.l.b16 %v1025
    %v1042 = vunpack.c.l.b16 %v1026
    %v1043 = vunpack.c.l.b16 %v1027
    %v1044 = vpack.c.b16 %v1041, %v1040
    %v1045 = vpack.c.b16 %v1043, %v1042
    %v1049 = vsel %vm197, %v1035, 0
    %1051 = vmatprep.subr.bf16.mxu0 0
    %1052 = vmatpush1.bf16.msra.mxu0 %v1044
    %1053 = vmatprep.subr.bf16.mxu0 0
    %1054 = vmatpush1.bf16.msra.mxu0 %v1045
    %1055 = vmatprep.subr.bf16.mxu0 0
    %1056 = vmatpush1.bf16.msra.mxu0 0
    %1057 = vmatprep.subr.bf16.mxu0 0
    %1058 = vmatpush1.bf16.msra.mxu0 0
    %1059 = vmatprep.subr.bf16.mxu0 0
    %1060 = vmatpush1.bf16.msra.mxu0 0
    %1061 = vmatprep.subr.bf16.mxu0 0
    %1062 = vmatpush1.bf16.msra.mxu0 0
    %1063 = vmatprep.subr.bf16.mxu0 0
    %1064 = vmatpush1.bf16.msra.mxu0 0
    %1065 = vmatprep.subr.bf16.mxu0 0
    %1066 = vmatpush1.bf16.msra.mxu0 0
    %1067 = vmatprep.subr.bf16.mxu0 0
    %1068 = vmatpush1.bf16.msra.mxu0 0
    %1069 = vmatprep.subr.bf16.mxu0 0
    %1070 = vmatpush1.bf16.msra.mxu0 0
    %1071 = vmatprep.subr.bf16.mxu0 0
    %1072 = vmatpush1.bf16.msra.mxu0 0
    %1073 = vmatprep.subr.bf16.mxu0 0
    %1074 = vmatpush1.bf16.msra.mxu0 0
    %1075 = vmatprep.subr.bf16.mxu0 0
    %1076 = vmatpush1.bf16.msra.mxu0 0
    %1077 = vmatprep.subr.bf16.mxu0 0
    %1078 = vmatpush1.bf16.msra.mxu0 0
    %1079 = vmatprep.subr.bf16.mxu0 0
    %1080 = vmatpush1.bf16.msra.mxu0 0
    %1081 = vmatprep.subr.bf16.mxu0 0
    %1082 = vmatpush1.bf16.msra.mxu0 0
    %1083 = vmatprep.mubr.bf16.mxu0 0
    %1084 = vmatmul.mubr.bf16.gmra.mrb[0].mxu0 %v1049
    %v1085 = vpop.f32.mrb[0].mxu0
    %v1086 = vadd.f32 %v1032, %v1085
    %v1087 = vpop.f32.mrb[0].mxu0
    %v1088 = vpop.f32.mrb[0].mxu0
    %v1089 = vpop.f32.mrb[0].mxu0
    %1090 = vdwg.mxu0
    %v1091 = vmax.f32 %v1086, 0.0
    %v1092 = vpack.c.bf16 %v1091, %v1091
    %v1093 = vld [vmem:[%s896 + $0x40] sm:$0xf]
    %v1094 = vld [vmem:[%s896 + $0x44] sm:$0xf]
    %v1095 = vld [vmem:[%s896 + $0x48] sm:$0xf]
    %v1096 = vld [vmem:[%s896 + $0x4c] sm:$0xf]
    %v1097 = vld [vmem:[%s909 + $0x2] sm:$0x1]
    %v1098 = vlaneseq
    %v1099 = vshrl.u32 %v1098, 7
    %v1100 = vsub.s32 0, %v1099
    %v1101 = vrot.slane %v1097, %v1100
    %v1106 = vunpack.c.l.b16 %v1093
    %v1107 = vunpack.c.l.b16 %v1094
    %v1108 = vunpack.c.l.b16 %v1095
    %v1109 = vunpack.c.l.b16 %v1096
    %v1110 = vpack.c.b16 %v1107, %v1106
    %v1111 = vpack.c.b16 %v1109, %v1108
    %v1115 = vsel %vm197, %v1092, 0
    %1117 = vmatprep.subr.bf16.mxu0 0
    %1118 = vmatpush1.bf16.msra.mxu0 %v1110
    %1119 = vmatprep.subr.bf16.mxu0 0
    %1120 = vmatpush1.bf16.msra.mxu0 %v1111
    %1121 = vmatprep.subr.bf16.mxu0 0
    %1122 = vmatpush1.bf16.msra.mxu0 0
    %1123 = vmatprep.subr.bf16.mxu0 0
    %1124 = vmatpush1.bf16.msra.mxu0 0
    %1125 = vmatprep.subr.bf16.mxu0 0
    %1126 = vmatpush1.bf16.msra.mxu0 0
    %1127 = vmatprep.subr.bf16.mxu0 0
    %1128 = vmatpush1.bf16.msra.mxu0 0
    %1129 = vmatprep.subr.bf16.mxu0 0
    %1130 = vmatpush1.bf16.msra.mxu0 0
    %1131 = vmatprep.subr.bf16.mxu0 0
    %1132 = vmatpush1.bf16.msra.mxu0 0
    %1133 = vmatprep.subr.bf16.mxu0 0
    %1134 = vmatpush1.bf16.msra.mxu0 0
    %1135 = vmatprep.subr.bf16.mxu0 0
    %1136 = vmatpush1.bf16.msra.mxu0 0
    %1137 = vmatprep.subr.bf16.mxu0 0
    %1138 = vmatpush1.bf16.msra.mxu0 0
    %1139 = vmatprep.subr.bf16.mxu0 0
    %1140 = vmatpush1.bf16.msra.mxu0 0
    %1141 = vmatprep.subr.bf16.mxu0 0
    %1142 = vmatpush1.bf16.msra.mxu0 0
    %1143 = vmatprep.subr.bf16.mxu0 0
    %1144 = vmatpush1.bf16.msra.mxu0 0
    %1145 = vmatprep.subr.bf16.mxu0 0
    %1146 = vmatpush1.bf16.msra.mxu0 0
    %1147 = vmatprep.subr.bf16.mxu0 0
    %1148 = vmatpush1.bf16.msra.mxu0 0
    %1149 = vmatprep.mubr.bf16.mxu0 0
    %1150 = vmatmul.mubr.bf16.gmra.mrb[0].mxu0 %v1115
    %v1151 = vpop.f32.mrb[0].mxu0
    %v1152 = vadd.f32 %v1101, %v1151
    %v1153 = vpop.f32.mrb[0].mxu0
    %v1154 = vpop.f32.mrb[0].mxu0
    %v1155 = vpop.f32.mrb[0].mxu0
    %1156 = vdwg.mxu0
    %v1157 = vsel %vm307, %v1152, -inf
    %1158 = vmax.xlane.f32.xlu0 %v1157
    %v1159 = vpop.xlane.xlu0 %1158
    %v1160 = vsub.f32 %v1152, %v1159
    %v1161 = vmul.f32 %v1160, 1.442695
    %v1162 = vpow.pop %v1161
    %v1163 = vsel %vm307, %v1162, 0.0
    %1164 = vadd.xlane.f32.xlu0 %v1163
    %v1165 = vpop.xlane.xlu0 %1164
    %v1166 = vrcp.pop %v1165
    %v1167 = vmul.f32 %v1162, %v1166
    %1169 = vrot.lane.b32.xlu0 %v1022, 104
    %v1170 = vpop.permute.xlu0 %1169
    %v1172 = vsel %vm307, %v1167, %v1170
    %v1173 = vsel %vm324, %v1172, 0.0
    %s1174 = scalar_lea.vmem [#allocation7], 24
    %1175 = vst [vmem:[%s1174] sm:$0xff] %v1173
    // Predicated region
    $region22: #{tpu_custom_call.1} parent=1 // pred_check
      _
    $region23: #{tpu_custom_call.1} parent=1 // pred_check_branch
      %1177 = sbr.rel (0) target = $region25
    $region24: #{tpu_custom_call.1} parent=1 // pred_region
      %s1179 = ssub.s32 512, 512
      %1180 = vsyncadd [#allocation4], %s1179
      %s1181 = sshll.u32 [#allocation7], 4
      %s1182 = int_to_ptr.vmem [resolvable:$true] %s1181
      %1187 = dma.vmem_to_hbm [thread:$0]  %s1182, 512, %s3, [#allocation4], 128, 128, 8
    $region25: #{tpu_custom_call.1} parent=1 // pred_fallthru
      _
    // Predicated region
    $region26: #{tpu_custom_call.1} parent=1 // pred_check
      _
    $region27: #{tpu_custom_call.1} parent=1 // pred_check_branch
      %1189 = sbr.rel (0) target = $region29
    $region28: #{tpu_custom_call.1} parent=1 // pred_region
      %1190 = dma.done [#allocation4], 512
    $region29: #{tpu_custom_call.1} parent=1 // pred_fallthru
      _
    %1191 = vsyncpa [#allocation3], 1
    %1192 = vsyncpa [#allocation6], 1
    %1193 = vsyncpa [#allocation4], 1

</llo_original>
